<compile_context>
chip_gen: v7x
topology: tpu7x:2x2x1
jax: 0.10.0
libtpu: 0.0.40
codegen_flags: <defaults>
</compile_context>

<pallas_src>
import numpy as np
import jax
import jax.numpy as jnp
from jax import lax
from jax.experimental import pallas as pl
from jax.experimental.pallas import tpu as pltpu

# ----------------------------- configuration --------------------------------
N      = 2            # batch
C_IN   = 4            # input channels
C_OUT  = 16           # output channels
T      = 8            # time steps
V      = 16           # graph nodes (num_nodes)
COFF   = 4            # coff_embedding
INTER  = C_OUT // COFF
S      = 3            # num_subset
CT_IN  = C_IN * T                           # 32
IT     = INTER * T                          # 32
CT     = C_OUT * T                          # 128  (lane axis)
K_T    = 9                                  # temporal kernel size (UnitTCN / conv_ta)
PAD_T  = (K_T - 1) // 2
K_SA   = V - 1 if V % 2 == 0 else V         # conv_sa kernel size
PAD_SA = (K_SA - 1) // 2
EPS_BN = 1e-5

# lane layout of the fused "x @ everything" matmul result (xw)
DOWN_OFF = 0                                # down branch (128 lanes)
RES_OFF  = CT                               # residual branch (128 lanes)
D_OFF    = 2 * CT                           # conv_d x3 (3 * 128 lanes, aligned)
AB_OFF   = 2 * CT + S * CT                  # (conv_a, conv_b) x3 (6 * 32 lanes)
XW_W     = AB_OFF + 2 * S * IT              # 832


# ------------------------------- fused kernel --------------------------------
def _aagcn_kernel(scal_ref, xs_ref, wx_ref, bx_ref, pat_ref, bigtile_ref,
                  emask_ref, ksaflat_ref, eyev_ref, ktam_ref, w1f_ref, b1_ref,
                  w2rep_ref, b2rep_ref, mtcn_ref, out_ref):
    f32 = jnp.float32
    xs = xs_ref[0]                                   # (V, C_in*T)
    alpha, bsa, bta = scal_ref[0], scal_ref[1], scal_ref[2]

    # -------- every 1x1 conv on the input in ONE matmul ----------------------
    # lanes: [down | res | conv_d x3 | (conv_a, conv_b) x3]; BN + biases folded.
    xw = jnp.dot(xs, wx_ref[...], preferred_element_type=f32) + bx_ref[...]
    down = xw[:, DOWN_OFF:DOWN_OFF + CT]             # incl. down-bn + gcn-bn bias
    res = xw[:, RES_OFF:RES_OFF + CT]                # incl. res-bn + tcn-bn bias

    # -------- UnitGCN adaptive graph convolution -----------------------------
    y = None
    for i in range(S):                               # num_subset, static unroll
        a0 = AB_OFF + 2 * IT * i
        a_m = xw[:, a0:a0 + IT]                      # conv_a_i(x): (V, inter*T)
        b_m = xw[:, a0 + IT:a0 + 2 * IT]             # conv_b_i(x): (V, inter*T)
        a1t = jnp.tanh(lax.dot_general(              # tanh(B A^T / IT) == A1^T
            b_m, a_m, (((1,), (1,)), ((), ())),
            preferred_element_type=f32) * (1.0 / IT))
        adj_t = pat_ref[i] + alpha * a1t             # (PA_i + alpha*A1)^T
        xd = xw[:, D_OFF + CT * i:D_OFF + CT * (i + 1)]   # x @ Wd_i (bn folded)
        contrib = jnp.dot(adj_t, xd, preferred_element_type=f32)
        y = contrib if y is None else y + contrib
    y1 = jnp.maximum(y + down, 0.0)                  # bn / down-bn folded, ReLU

    # -------- spatial attention (conv_sa, node gate) --------------------------
    xp = jnp.dot(y1, bigtile_ref[...], preferred_element_type=f32)   # (V, V*C): T-mean tiled
    g = jnp.dot(xp * emask_ref[...], ksaflat_ref[...],
                preferred_element_type=f32)          # per-node contributions (V, V)
    g1 = jax.nn.sigmoid(jnp.sum(g, axis=0, keepdims=True) + bsa) + 1.0   # (1, V)
    y2 = jnp.dot(g1 * eyev_ref[...], y1, preferred_element_type=f32)     # diag gate == y1*(g+1)

    # -------- temporal attention (conv_ta, time gate) -------------------------
    se_t = jnp.sum(y2, axis=0, keepdims=True) * (1.0 / V)                # (1, CT)
    g2 = jax.nn.sigmoid(jnp.dot(se_t, ktam_ref[...],
                                preferred_element_type=f32) + bta) + 1.0
    y3 = y2 * g2

    # -------- channel attention (fc1c / fc2c) ---------------------------------
    pooled = jnp.sum(y3, axis=0, keepdims=True) * (1.0 / V)              # (1, CT)
    h = jnp.maximum(jnp.dot(pooled, w1f_ref[...],
                            preferred_element_type=f32) + b1_ref[...], 0.0)
    g3 = jax.nn.sigmoid(jnp.dot(h, w2rep_ref[...],
                                preferred_element_type=f32) + b2rep_ref[...]) + 1.0
    y4 = y3 * g3

    # -------- UnitTCN(9x1, tbn folded) + residual UnitTCN(k=1) + ReLU ---------
    t = jnp.dot(y4, mtcn_ref[...], preferred_element_type=f32)
    out_ref[0] = jnp.maximum(t + res, 0.0)


# ------------------------------ pallas wrapper --------------------------------
_W_NAMES = ['WX', 'bX', 'PAT', 'BigTile', 'Emask', 'KsaFlat', 'EyeV', 'KtaM',
            'W1f', 'b1', 'W2rep', 'b2rep', 'MtcnT']


def aagcn_fused(xs, p):
    weights = [p[k] for k in _W_NAMES]

    def shared(arr):                    # full-array, VMEM-resident, constant index
        nd = arr.ndim
        return pl.BlockSpec(tuple(arr.shape), lambda n, _nd=nd: (0,) * _nd)

    return pl.pallas_call(
        _aagcn_kernel,
        grid=(N,),
        in_specs=[pl.BlockSpec(memory_space=pltpu.MemorySpace.SMEM),          # scalars
                  pl.BlockSpec((1, V, CT_IN), lambda n: (n, 0, 0))]           # x slab
                 + [shared(a) for a in weights],
        out_specs=pl.BlockSpec((1, V, CT), lambda n: (n, 0, 0)),
        out_shape=jax.ShapeDtypeStruct((N, V, CT), jnp.float32),
        compiler_params=pltpu.CompilerParams(
            dimension_semantics=("parallel",)),
    )(p['scal'], xs, *weights)


def aagcn_forward(x, p):
    # (N, C, T, V) -> lane-dense slabs (N, V, C*T); row = node, col = c*T + t.
    # NOTE: if the consumer accepts slab layout, call aagcn_fused directly and
    # drop these standalone relayout ops.
    xs = jnp.transpose(x.reshape(N, CT_IN, V), (0, 2, 1))
    out = aagcn_fused(xs, p)                                   # (N, V, C_out*T)
    return jnp.transpose(out.reshape(N, V, C_OUT, T), (0, 2, 3, 1))


# ------------------------------ parameter setup -------------------------------
def _kron_t_right(w):
    """kron(w, I_T) transposed for right-multiplication: (in*T, out*T)."""
    return np.kron(w, np.eye(T, dtype=np.float32)).T.astype(np.float32)


def build_graph_A():
    """GraphAAGCN: [I, L1-col-normalized inward adj, L1-col-normalized outward adj]."""
    adj = np.zeros((V, V), np.float32)
    adj[np.arange(V - 1), np.arange(1, V)] = 1.0      # chain graph 0->1->...->V-1

    def col_l1(a):
        s = a.sum(axis=0, keepdims=True)
        return a / np.maximum(s, 1e-12)

    return np.stack([np.eye(V, dtype=np.float32), col_l1(adj), col_l1(adj.T)])


def init_raw_params(seed=0):
    rng = np.random.RandomState(seed)

    def nrm(*shape, s=0.1):
        return (s * rng.randn(*shape)).astype(np.float32)

    def bn(c):
        return dict(g=(1.0 + 0.1 * rng.randn(c)).astype(np.float32),
                    b=nrm(c), m=nrm(c),
                    v=rng.uniform(0.5, 1.5, c).astype(np.float32))

    return dict(
        PA=(build_graph_A() + nrm(S, V, V, s=0.02)).astype(np.float32),
        alpha=np.float32(0.3),
        Wa=nrm(S, INTER, C_IN), ba=nrm(S, INTER),
        Wb=nrm(S, INTER, C_IN), bb=nrm(S, INTER),
        Wd=nrm(S, C_OUT, C_IN), bd=nrm(S, C_OUT),
        Wdown=nrm(C_OUT, C_IN), bdown=nrm(C_OUT),
        bn=bn(C_OUT), dbn=bn(C_OUT),
        Wsa=nrm(1, C_OUT, K_SA), bsa=nrm(1),
        Wta=nrm(1, C_OUT, K_T), bta=nrm(1),
        W1=nrm(C_OUT // 2, C_OUT), b1=nrm(C_OUT // 2),
        W2=nrm(C_OUT, C_OUT // 2), b2=nrm(C_OUT),
        Wt=nrm(C_OUT, C_OUT, K_T), bt=nrm(C_OUT), tbn=bn(C_OUT),
        Wr=nrm(C_OUT, C_IN), br=nrm(C_OUT), rbn=bn(C_OUT),
    )


def derive_kernel_params(raw):
    def fold_bn(d):
        s = (d['g'] / np.sqrt(d['v'] + EPS_BN)).astype(np.float32)
        return s, (d['b'] - d['m'] * s).astype(np.float32)

    bn_s, bn_b = fold_bn(raw['bn'])
    dbn_s, dbn_b = fold_bn(raw['dbn'])
    tbn_s, tbn_b = fold_bn(raw['tbn'])
    rbn_s, rbn_b = fold_bn(raw['rbn'])

    def rep(v):                      # per-channel (C,) -> per-lane (C*T,)
        return np.repeat(np.asarray(v, np.float32), T)

    # ---- one big "x @ everything" weight: [down | res | conv_d x3 | a/b x3] ----
    WX = np.zeros((CT_IN, XW_W), np.float32)
    bX = np.zeros((1, XW_W), np.float32)
    # down branch: conv1x1 + dbn folded; gcn-branch bias (bd sum + bn) folded here too
    WX[:, DOWN_OFF:DOWN_OFF + CT] = _kron_t_right(raw['Wdown']) * rep(dbn_s)[None, :]
    bX[0, DOWN_OFF:DOWN_OFF + CT] = (rep(raw['bdown'] * dbn_s + dbn_b)
                                     + rep(raw['bd'].sum(axis=0) * bn_s + bn_b))
    # residual branch: conv1x1 + rbn folded; tcn bias (bt + tbn) folded here too
    WX[:, RES_OFF:RES_OFF + CT] = _kron_t_right(raw['Wr']) * rep(rbn_s)[None, :]
    bX[0, RES_OFF:RES_OFF + CT] = (rep(raw['br'] * rbn_s + rbn_b)
                                   + rep(raw['bt'] * tbn_s + tbn_b))
    # conv_d (bn scale folded into weights; their biases live in the down lanes)
    for i in range(S):
        WX[:, D_OFF + CT * i:D_OFF + CT * (i + 1)] = \
            _kron_t_right(raw['Wd'][i]) * rep(bn_s)[None, :]
    # conv_a / conv_b (interleaved per subset)
    for i in range(S):
        a0 = AB_OFF + 2 * IT * i
        WX[:, a0:a0 + IT] = _kron_t_right(raw['Wa'][i])
        WX[:, a0 + IT:a0 + 2 * IT] = _kron_t_right(raw['Wb'][i])
        bX[0, a0:a0 + IT] = np.repeat(raw['ba'][i], T)
        bX[0, a0 + IT:a0 + 2 * IT] = np.repeat(raw['bb'][i], T)

    PAT = np.transpose(raw['PA'], (0, 2, 1)).copy()

    # mean over T as a right-multiplication: (C_out*T, C_out)
    MavgTT = np.kron(np.eye(C_OUT, dtype=np.float32),
                     np.ones((T, 1), np.float32) / T)
    # spatial attention: se tiled per node group, block-diag mask, flattened Toeplitz
    BigTile = np.tile(MavgTT, (1, V))                                     # (CT, V*C_OUT)
    Emask = np.kron(np.eye(V, dtype=np.float32),
                    np.ones((1, C_OUT), np.float32))                      # (V, V*C_OUT)
    Ksa = np.zeros((C_OUT, V, V), np.float32)                             # Ksa[c, vo, u]
    for vo in range(V):
        for u in range(V):
            k = u - vo + PAD_SA
            if 0 <= k < K_SA:
                Ksa[:, vo, u] = raw['Wsa'][0, :, k]
    KsaFlat = np.transpose(Ksa, (2, 0, 1)).reshape(V * C_OUT, V).copy()   # (V*C_OUT, V)
    EyeV = np.eye(V, dtype=np.float32)

    # conv_ta (1-D conv over time) as a single (CT, CT) matrix; per-t logit
    # replicated across all output channel blocks (broadcast-ready row).
    ToepT = np.zeros((C_OUT, T, T), np.float32)
    for t in range(T):
        for t2 in range(T):
            k = t - t2 + PAD_T
            if 0 <= k < K_T:
                ToepT[:, t, t2] = raw['Wta'][0, :, k]
    KtaM = np.concatenate([np.tile(ToepT[c], (1, C_OUT)) for c in range(C_OUT)],
                          axis=0)                                          # (CT, CT)

    # channel attention with the T-mean pool / replication folded into the weights
    W1f = (MavgTT @ raw['W1'].T).astype(np.float32)                        # (CT, C_OUT//2)
    b1 = raw['b1'][None, :].astype(np.float32)
    RepT = np.kron(np.eye(C_OUT, dtype=np.float32), np.ones((1, T), np.float32))
    W2rep = (raw['W2'].T @ RepT).astype(np.float32)                        # (C_OUT//2, CT)
    b2rep = (raw['b2'][None, :] @ RepT).astype(np.float32)                 # (1, CT)

    # (9,1) temporal conv as block-Toeplitz (right-multiply form), tbn folded
    Mtcn = np.zeros((CT, CT), np.float32)
    rows0 = np.arange(C_OUT) * T
    for k in range(K_T):
        for t in range(T):
            tt = t + k - PAD_T
            if 0 <= tt < T:
                Mtcn[np.ix_(rows0 + t, rows0 + tt)] = raw['Wt'][:, :, k]
    MtcnT = (Mtcn.T * rep(tbn_s)[None, :]).astype(np.float32)

    scal = np.array([raw['alpha'], raw['bsa'][0], raw['bta'][0]], np.float32)

    p = dict(scal=scal, WX=WX, bX=bX, PAT=PAT, BigTile=BigTile, Emask=Emask,
             KsaFlat=KsaFlat, EyeV=EyeV, KtaM=KtaM, W1f=W1f, b1=b1,
             W2rep=W2rep, b2rep=b2rep, MtcnT=MtcnT)
    return {k: jnp.asarray(v) for k, v in p.items()}


# ------------------------- pure-JAX reference (for checking) -----------------
def reference_forward(x, raw):
    def conv1x1(xx, w, b):
        return jnp.einsum('oc,nctv->notv', w, xx) + b[None, :, None, None]

    def bn(xx, d):
        sc = d['g'] / np.sqrt(d['v'] + EPS_BN)
        sh = d['b'] - d['m'] * sc
        return xx * sc[None, :, None, None] + sh[None, :, None, None]

    xf = x.reshape(N, C_IN * T, V)
    y = None
    for i in range(S):
        xa = conv1x1(x, raw['Wa'][i], raw['ba'][i])
        xb = conv1x1(x, raw['Wb'][i], raw['bb'][i])
        A1 = xa.transpose(0, 3, 1, 2).reshape(N, V, INTER * T)
        A2 = xb.reshape(N, INTER * T, V)
        A1 = jnp.tanh(jnp.matmul(A1, A2) / (INTER * T))
        Ai = raw['PA'][i] + A1 * raw['alpha']
        z = jnp.matmul(xf, Ai).reshape(N, C_IN, T, V)
        z = conv1x1(z, raw['Wd'][i], raw['bd'][i])
        y = z if y is None else y + z
    y = bn(y, raw['bn'])
    y = y + bn(conv1x1(x, raw['Wdown'], raw['bdown']), raw['dbn'])
    y = jax.nn.relu(y)
    # attention
    se = y.mean(-2)
    se1 = jax.nn.sigmoid(
        lax.conv_general_dilated(se, raw['Wsa'], (1,), [(PAD_SA, PAD_SA)],
                                 dimension_numbers=('NCH', 'OIH', 'NCH'))
        + raw['bsa'][None, :, None])
    y = y * se1[:, :, None, :] + y
    se = y.mean(-1)
    se1 = jax.nn.sigmoid(
        lax.conv_general_dilated(se, raw['Wta'], (1,), [(PAD_T, PAD_T)],
                                 dimension_numbers=('NCH', 'OIH', 'NCH'))
        + raw['bta'][None, :, None])
    y = y * se1[:, :, :, None] + y
    se = y.mean(-1).mean(-1)
    se1 = jax.nn.relu(se @ raw['W1'].T + raw['b1'])
    se2 = jax.nn.sigmoid(se1 @ raw['W2'].T + raw['b2'])
    y = y * se2[:, :, None, None] + y
    # UnitTCN + residual UnitTCN(kernel_size=1) + relu
    tcn = lax.conv_general_dilated(y, raw['Wt'][:, :, :, None], (1, 1),
                                   [(PAD_T, PAD_T), (0, 0)],
                                   dimension_numbers=('NCHW', 'OIHW', 'NCHW'))
    tcn = bn(tcn + raw['bt'][None, :, None, None], raw['tbn'])
    res = bn(conv1x1(x, raw['Wr'], raw['br']), raw['rbn'])
    return jax.nn.relu(tcn + res)


# ------------------------------------ main ------------------------------------
if __name__ == "__main__":
    key = jax.random.PRNGKey(0)
    x = jax.random.normal(key, (N, C_IN, T, V), jnp.float32)

    raw = init_raw_params(0)
    params = derive_kernel_params(raw)

    fwd = jax.jit(lambda xx: aagcn_forward(xx, params))
    out = jax.block_until_ready(fwd(x))
    assert out.shape == (N, C_OUT, T, V) and out.dtype == jnp.float32

    with jax.default_matmul_precision("highest"):
        ref = jax.block_until_ready(jax.jit(lambda xx: reference_forward(xx, raw))(x))
    max_err = float(jnp.max(jnp.abs(out - ref)))
    rel = max_err / (float(jnp.max(jnp.abs(ref))) + 1e-6)
    assert rel < 2e-2, f"mismatch vs reference: max abs err {max_err}, rel {rel}"

    print("KERNEL_OK")
</pallas_src>

<mosaic_0001>
module attributes {stable_mosaic.version = 11 : i64} {
  func.func @_aagcn_kernel(%arg0: i32, %arg1: memref<3xf32, #tpu.memory_space<smem>>, %arg2: memref<1x16x32xf32, #tpu.memory_space<vmem>>, %arg3: memref<32x832xf32, #tpu.memory_space<vmem>>, %arg4: memref<1x832xf32, #tpu.memory_space<vmem>>, %arg5: memref<3x16x16xf32, #tpu.memory_space<vmem>>, %arg6: memref<128x256xf32, #tpu.memory_space<vmem>>, %arg7: memref<16x256xf32, #tpu.memory_space<vmem>>, %arg8: memref<256x16xf32, #tpu.memory_space<vmem>>, %arg9: memref<16x16xf32, #tpu.memory_space<vmem>>, %arg10: memref<128x128xf32, #tpu.memory_space<vmem>>, %arg11: memref<128x8xf32, #tpu.memory_space<vmem>>, %arg12: memref<1x8xf32, #tpu.memory_space<vmem>>, %arg13: memref<8x128xf32, #tpu.memory_space<vmem>>, %arg14: memref<1x128xf32, #tpu.memory_space<vmem>>, %arg15: memref<128x128xf32, #tpu.memory_space<vmem>>, %arg16: memref<1x16x128xf32, #tpu.memory_space<vmem>>) attributes {dimension_semantics = [#tpu.dimension_semantics<parallel>], iteration_bounds = array<i64: 2>, scalar_prefetch = 0 : i64, scratch_operands = 0 : i64, tpu.core_type = #tpu.core_type<tc>, window_params = [{transform_indices = @transform_0, window_bounds = array<i64: 3>}, {transform_indices = @transform_1, window_bounds = array<i64: 1, 16, 32>}, {pipeline_mode = #tpu.pipeline_mode<synchronous>, transform_indices = @transform_2, window_bounds = array<i64: 32, 832>}, {pipeline_mode = #tpu.pipeline_mode<synchronous>, transform_indices = @transform_3, window_bounds = array<i64: 1, 832>}, {pipeline_mode = #tpu.pipeline_mode<synchronous>, transform_indices = @transform_4, window_bounds = array<i64: 3, 16, 16>}, {pipeline_mode = #tpu.pipeline_mode<synchronous>, transform_indices = @transform_5, window_bounds = array<i64: 128, 256>}, {pipeline_mode = #tpu.pipeline_mode<synchronous>, transform_indices = @transform_6, window_bounds = array<i64: 16, 256>}, {pipeline_mode = #tpu.pipeline_mode<synchronous>, transform_indices = @transform_7, window_bounds = array<i64: 256, 16>}, {pipeline_mode = #tpu.pipeline_mode<synchronous>, transform_indices = @transform_8, window_bounds = array<i64: 16, 16>}, {pipeline_mode = #tpu.pipeline_mode<synchronous>, transform_indices = @transform_9, window_bounds = array<i64: 128, 128>}, {pipeline_mode = #tpu.pipeline_mode<synchronous>, transform_indices = @transform_10, window_bounds = array<i64: 128, 8>}, {pipeline_mode = #tpu.pipeline_mode<synchronous>, transform_indices = @transform_11, window_bounds = array<i64: 1, 8>}, {pipeline_mode = #tpu.pipeline_mode<synchronous>, transform_indices = @transform_12, window_bounds = array<i64: 8, 128>}, {pipeline_mode = #tpu.pipeline_mode<synchronous>, transform_indices = @transform_13, window_bounds = array<i64: 1, 128>}, {pipeline_mode = #tpu.pipeline_mode<synchronous>, transform_indices = @transform_14, window_bounds = array<i64: 128, 128>}, {transform_indices = @transform_15, window_bounds = array<i64: 1, 16, 128>}]} {
    %c0 = arith.constant 0 : index
    %c0_0 = arith.constant 0 : index
    %c0_1 = arith.constant 0 : index
    %0 = vector.load %arg2[%c0, %c0_0, %c0_1] : memref<1x16x32xf32, #tpu.memory_space<vmem>>, vector<1x16x32xf32>
    %1 = vector.shape_cast %0 : vector<1x16x32xf32> to vector<16x32xf32>
    %c0_2 = arith.constant 0 : index
    %2 = memref.load %arg1[%c0_2] : memref<3xf32, #tpu.memory_space<smem>>
    %c1 = arith.constant 1 : index
    %3 = memref.load %arg1[%c1] : memref<3xf32, #tpu.memory_space<smem>>
    %c2 = arith.constant 2 : index
    %4 = memref.load %arg1[%c2] : memref<3xf32, #tpu.memory_space<smem>>
    %c0_3 = arith.constant 0 : index
    %c0_4 = arith.constant 0 : index
    %5 = vector.load %arg3[%c0_3, %c0_4] : memref<32x832xf32, #tpu.memory_space<vmem>>, vector<32x832xf32>
    %cst = arith.constant dense<0.000000e+00> : vector<16x832xf32>
    %6 = tpu.matmul %1, %5, %cst {dimension_numbers = #tpu.dot_dimension_numbers<[1], [0], [0], [1], [0, 0, 1, 1], [], []>} : vector<16x32xf32>, vector<32x832xf32>, vector<16x832xf32> -> vector<16x832xf32>
    %c0_5 = arith.constant 0 : index
    %c0_6 = arith.constant 0 : index
    %7 = vector.load %arg4[%c0_5, %c0_6] : memref<1x832xf32, #tpu.memory_space<vmem>>, vector<1x832xf32>
    %8 = vector.broadcast %7 : vector<1x832xf32> to vector<16x832xf32>
    %9 = arith.addf %6, %8 : vector<16x832xf32>
    %10 = vector.extract_strided_slice %9 {offsets = [0, 0], sizes = [16, 128], strides = [1, 1]} : vector<16x832xf32> to vector<16x128xf32>
    %11 = vector.extract_strided_slice %9 {offsets = [0, 128], sizes = [16, 128], strides = [1, 1]} : vector<16x832xf32> to vector<16x128xf32>
    %12 = vector.extract_strided_slice %9 {offsets = [0, 640], sizes = [16, 32], strides = [1, 1]} : vector<16x832xf32> to vector<16x32xf32>
    %13 = vector.extract_strided_slice %9 {offsets = [0, 672], sizes = [16, 32], strides = [1, 1]} : vector<16x832xf32> to vector<16x32xf32>
    %cst_7 = arith.constant dense<0.000000e+00> : vector<16x16xf32>
    %14 = tpu.matmul %13, %12, %cst_7 {dimension_numbers = #tpu.dot_dimension_numbers<[1], [1], [0], [0], [0, 0, 1, 0], [], []>} : vector<16x32xf32>, vector<16x32xf32>, vector<16x16xf32> -> vector<16x16xf32>
    %cst_8 = arith.constant 3.125000e-02 : f32
    %15 = vector.broadcast %cst_8 : f32 to vector<16x16xf32>
    %16 = arith.mulf %14, %15 : vector<16x16xf32>
    %17 = math.tanh %16 : vector<16x16xf32>
    %c0_9 = arith.constant 0 : index
    %c0_10 = arith.constant 0 : index
    %c0_11 = arith.constant 0 : index
    %18 = vector.load %arg5[%c0_9, %c0_10, %c0_11] : memref<3x16x16xf32, #tpu.memory_space<vmem>>, vector<1x16x16xf32>
    %19 = vector.shape_cast %18 : vector<1x16x16xf32> to vector<16x16xf32>
    %20 = vector.broadcast %2 : f32 to vector<16x16xf32>
    %21 = arith.mulf %20, %17 : vector<16x16xf32>
    %22 = arith.addf %19, %21 : vector<16x16xf32>
    %23 = vector.extract_strided_slice %9 {offsets = [0, 256], sizes = [16, 128], strides = [1, 1]} : vector<16x832xf32> to vector<16x128xf32>
    %cst_12 = arith.constant dense<0.000000e+00> : vector<16x128xf32>
    %24 = tpu.matmul %22, %23, %cst_12 {dimension_numbers = #tpu.dot_dimension_numbers<[1], [0], [0], [1], [0, 0, 1, 1], [], []>} : vector<16x16xf32>, vector<16x128xf32>, vector<16x128xf32> -> vector<16x128xf32>
    %25 = vector.extract_strided_slice %9 {offsets = [0, 704], sizes = [16, 32], strides = [1, 1]} : vector<16x832xf32> to vector<16x32xf32>
    %26 = vector.extract_strided_slice %9 {offsets = [0, 736], sizes = [16, 32], strides = [1, 1]} : vector<16x832xf32> to vector<16x32xf32>
    %cst_13 = arith.constant dense<0.000000e+00> : vector<16x16xf32>
    %27 = tpu.matmul %26, %25, %cst_13 {dimension_numbers = #tpu.dot_dimension_numbers<[1], [1], [0], [0], [0, 0, 1, 0], [], []>} : vector<16x32xf32>, vector<16x32xf32>, vector<16x16xf32> -> vector<16x16xf32>
    %cst_14 = arith.constant 3.125000e-02 : f32
    %28 = vector.broadcast %cst_14 : f32 to vector<16x16xf32>
    %29 = arith.mulf %27, %28 : vector<16x16xf32>
    %30 = math.tanh %29 : vector<16x16xf32>
    %c1_15 = arith.constant 1 : index
    %c0_16 = arith.constant 0 : index
    %c0_17 = arith.constant 0 : index
    %31 = vector.load %arg5[%c1_15, %c0_16, %c0_17] : memref<3x16x16xf32, #tpu.memory_space<vmem>>, vector<1x16x16xf32>
    %32 = vector.shape_cast %31 : vector<1x16x16xf32> to vector<16x16xf32>
    %33 = vector.broadcast %2 : f32 to vector<16x16xf32>
    %34 = arith.mulf %33, %30 : vector<16x16xf32>
    %35 = arith.addf %32, %34 : vector<16x16xf32>
    %36 = vector.extract_strided_slice %9 {offsets = [0, 384], sizes = [16, 128], strides = [1, 1]} : vector<16x832xf32> to vector<16x128xf32>
    %cst_18 = arith.constant dense<0.000000e+00> : vector<16x128xf32>
    %37 = tpu.matmul %35, %36, %cst_18 {dimension_numbers = #tpu.dot_dimension_numbers<[1], [0], [0], [1], [0, 0, 1, 1], [], []>} : vector<16x16xf32>, vector<16x128xf32>, vector<16x128xf32> -> vector<16x128xf32>
    %38 = arith.addf %24, %37 : vector<16x128xf32>
    %39 = vector.extract_strided_slice %9 {offsets = [0, 768], sizes = [16, 32], strides = [1, 1]} : vector<16x832xf32> to vector<16x32xf32>
    %40 = vector.extract_strided_slice %9 {offsets = [0, 800], sizes = [16, 32], strides = [1, 1]} : vector<16x832xf32> to vector<16x32xf32>
    %cst_19 = arith.constant dense<0.000000e+00> : vector<16x16xf32>
    %41 = tpu.matmul %40, %39, %cst_19 {dimension_numbers = #tpu.dot_dimension_numbers<[1], [1], [0], [0], [0, 0, 1, 0], [], []>} : vector<16x32xf32>, vector<16x32xf32>, vector<16x16xf32> -> vector<16x16xf32>
    %cst_20 = arith.constant 3.125000e-02 : f32
    %42 = vector.broadcast %cst_20 : f32 to vector<16x16xf32>
    %43 = arith.mulf %41, %42 : vector<16x16xf32>
    %44 = math.tanh %43 : vector<16x16xf32>
    %c2_21 = arith.constant 2 : index
    %c0_22 = arith.constant 0 : index
    %c0_23 = arith.constant 0 : index
    %45 = vector.load %arg5[%c2_21, %c0_22, %c0_23] : memref<3x16x16xf32, #tpu.memory_space<vmem>>, vector<1x16x16xf32>
    %46 = vector.shape_cast %45 : vector<1x16x16xf32> to vector<16x16xf32>
    %47 = vector.broadcast %2 : f32 to vector<16x16xf32>
    %48 = arith.mulf %47, %44 : vector<16x16xf32>
    %49 = arith.addf %46, %48 : vector<16x16xf32>
    %50 = vector.extract_strided_slice %9 {offsets = [0, 512], sizes = [16, 128], strides = [1, 1]} : vector<16x832xf32> to vector<16x128xf32>
    %cst_24 = arith.constant dense<0.000000e+00> : vector<16x128xf32>
    %51 = tpu.matmul %49, %50, %cst_24 {dimension_numbers = #tpu.dot_dimension_numbers<[1], [0], [0], [1], [0, 0, 1, 1], [], []>} : vector<16x16xf32>, vector<16x128xf32>, vector<16x128xf32> -> vector<16x128xf32>
    %52 = arith.addf %38, %51 : vector<16x128xf32>
    %53 = arith.addf %52, %10 : vector<16x128xf32>
    %cst_25 = arith.constant 0.000000e+00 : f32
    %54 = vector.broadcast %cst_25 : f32 to vector<16x128xf32>
    %55 = arith.maximumf %53, %54 : vector<16x128xf32>
    %c0_26 = arith.constant 0 : index
    %c0_27 = arith.constant 0 : index
    %56 = vector.load %arg6[%c0_26, %c0_27] : memref<128x256xf32, #tpu.memory_space<vmem>>, vector<128x256xf32>
    %cst_28 = arith.constant dense<0.000000e+00> : vector<16x256xf32>
    %57 = tpu.matmul %55, %56, %cst_28 {dimension_numbers = #tpu.dot_dimension_numbers<[1], [0], [0], [1], [0, 0, 1, 1], [], []>} : vector<16x128xf32>, vector<128x256xf32>, vector<16x256xf32> -> vector<16x256xf32>
    %c0_29 = arith.constant 0 : index
    %c0_30 = arith.constant 0 : index
    %58 = vector.load %arg7[%c0_29, %c0_30] : memref<16x256xf32, #tpu.memory_space<vmem>>, vector<16x256xf32>
    %59 = arith.mulf %57, %58 : vector<16x256xf32>
    %c0_31 = arith.constant 0 : index
    %c0_32 = arith.constant 0 : index
    %60 = vector.load %arg8[%c0_31, %c0_32] : memref<256x16xf32, #tpu.memory_space<vmem>>, vector<256x16xf32>
    %cst_33 = arith.constant dense<0.000000e+00> : vector<16x16xf32>
    %61 = tpu.matmul %59, %60, %cst_33 {dimension_numbers = #tpu.dot_dimension_numbers<[1], [0], [0], [1], [0, 0, 1, 1], [], []>} : vector<16x256xf32>, vector<256x16xf32>, vector<16x16xf32> -> vector<16x16xf32>
    %cst_34 = arith.constant dense<0.000000e+00> : vector<16xf32>
    %62 = vector.multi_reduction <add>, %61, %cst_34 [0] : vector<16x16xf32> to vector<16xf32>
    %63 = vector.shape_cast %62 : vector<16xf32> to vector<1x16xf32>
    %64 = vector.broadcast %3 : f32 to vector<1x16xf32>
    %65 = arith.addf %63, %64 : vector<1x16xf32>
    %66 = arith.negf %65 : vector<1x16xf32>
    %67 = math.exp %66 : vector<1x16xf32>
    %cst_35 = arith.constant 1.000000e+00 : f32
    %68 = vector.broadcast %cst_35 : f32 to vector<1x16xf32>
    %69 = arith.addf %68, %67 : vector<1x16xf32>
    %70 = arith.divf %68, %69 : vector<1x16xf32>
    %cst_36 = arith.constant 1.000000e+00 : f32
    %71 = vector.broadcast %cst_36 : f32 to vector<1x16xf32>
    %72 = arith.addf %70, %71 : vector<1x16xf32>
    %c0_37 = arith.constant 0 : index
    %c0_38 = arith.constant 0 : index
    %73 = vector.load %arg9[%c0_37, %c0_38] : memref<16x16xf32, #tpu.memory_space<vmem>>, vector<16x16xf32>
    %74 = vector.broadcast %72 : vector<1x16xf32> to vector<16x16xf32>
    %75 = arith.mulf %74, %73 : vector<16x16xf32>
    %cst_39 = arith.constant dense<0.000000e+00> : vector<16x128xf32>
    %76 = tpu.matmul %75, %55, %cst_39 {dimension_numbers = #tpu.dot_dimension_numbers<[1], [0], [0], [1], [0, 0, 1, 1], [], []>} : vector<16x16xf32>, vector<16x128xf32>, vector<16x128xf32> -> vector<16x128xf32>
    %cst_40 = arith.constant dense<0.000000e+00> : vector<128xf32>
    %77 = vector.multi_reduction <add>, %76, %cst_40 [0] : vector<16x128xf32> to vector<128xf32>
    %78 = vector.shape_cast %77 : vector<128xf32> to vector<1x128xf32>
    %cst_41 = arith.constant 6.250000e-02 : f32
    %79 = vector.broadcast %cst_41 : f32 to vector<1x128xf32>
    %80 = arith.mulf %78, %79 : vector<1x128xf32>
    %c0_42 = arith.constant 0 : index
    %c0_43 = arith.constant 0 : index
    %81 = vector.load %arg10[%c0_42, %c0_43] : memref<128x128xf32, #tpu.memory_space<vmem>>, vector<128x128xf32>
    %cst_44 = arith.constant dense<0.000000e+00> : vector<1x128xf32>
    %82 = tpu.matmul %80, %81, %cst_44 {dimension_numbers = #tpu.dot_dimension_numbers<[1], [0], [0], [1], [0, 0, 1, 1], [], []>} : vector<1x128xf32>, vector<128x128xf32>, vector<1x128xf32> -> vector<1x128xf32>
    %83 = vector.broadcast %4 : f32 to vector<1x128xf32>
    %84 = arith.addf %82, %83 : vector<1x128xf32>
    %85 = arith.negf %84 : vector<1x128xf32>
    %86 = math.exp %85 : vector<1x128xf32>
    %cst_45 = arith.constant 1.000000e+00 : f32
    %87 = vector.broadcast %cst_45 : f32 to vector<1x128xf32>
    %88 = arith.addf %87, %86 : vector<1x128xf32>
    %89 = arith.divf %87, %88 : vector<1x128xf32>
    %cst_46 = arith.constant 1.000000e+00 : f32
    %90 = vector.broadcast %cst_46 : f32 to vector<1x128xf32>
    %91 = arith.addf %89, %90 : vector<1x128xf32>
    %92 = vector.broadcast %91 : vector<1x128xf32> to vector<16x128xf32>
    %93 = arith.mulf %76, %92 : vector<16x128xf32>
    %cst_47 = arith.constant dense<0.000000e+00> : vector<128xf32>
    %94 = vector.multi_reduction <add>, %93, %cst_47 [0] : vector<16x128xf32> to vector<128xf32>
    %95 = vector.shape_cast %94 : vector<128xf32> to vector<1x128xf32>
    %cst_48 = arith.constant 6.250000e-02 : f32
    %96 = vector.broadcast %cst_48 : f32 to vector<1x128xf32>
    %97 = arith.mulf %95, %96 : vector<1x128xf32>
    %c0_49 = arith.constant 0 : index
    %c0_50 = arith.constant 0 : index
    %98 = vector.load %arg11[%c0_49, %c0_50] : memref<128x8xf32, #tpu.memory_space<vmem>>, vector<128x8xf32>
    %cst_51 = arith.constant dense<0.000000e+00> : vector<1x8xf32>
    %99 = tpu.matmul %97, %98, %cst_51 {dimension_numbers = #tpu.dot_dimension_numbers<[1], [0], [0], [1], [0, 0, 1, 1], [], []>} : vector<1x128xf32>, vector<128x8xf32>, vector<1x8xf32> -> vector<1x8xf32>
    %c0_52 = arith.constant 0 : index
    %c0_53 = arith.constant 0 : index
    %100 = vector.load %arg12[%c0_52, %c0_53] : memref<1x8xf32, #tpu.memory_space<vmem>>, vector<1x8xf32>
    %101 = arith.addf %99, %100 : vector<1x8xf32>
    %cst_54 = arith.constant 0.000000e+00 : f32
    %102 = vector.broadcast %cst_54 : f32 to vector<1x8xf32>
    %103 = arith.maximumf %101, %102 : vector<1x8xf32>
    %c0_55 = arith.constant 0 : index
    %c0_56 = arith.constant 0 : index
    %104 = vector.load %arg13[%c0_55, %c0_56] : memref<8x128xf32, #tpu.memory_space<vmem>>, vector<8x128xf32>
    %cst_57 = arith.constant dense<0.000000e+00> : vector<1x128xf32>
    %105 = tpu.matmul %103, %104, %cst_57 {dimension_numbers = #tpu.dot_dimension_numbers<[1], [0], [0], [1], [0, 0, 1, 1], [], []>} : vector<1x8xf32>, vector<8x128xf32>, vector<1x128xf32> -> vector<1x128xf32>
    %c0_58 = arith.constant 0 : index
    %c0_59 = arith.constant 0 : index
    %106 = vector.load %arg14[%c0_58, %c0_59] : memref<1x128xf32, #tpu.memory_space<vmem>>, vector<1x128xf32>
    %107 = arith.addf %105, %106 : vector<1x128xf32>
    %108 = arith.negf %107 : vector<1x128xf32>
    %109 = math.exp %108 : vector<1x128xf32>
    %cst_60 = arith.constant 1.000000e+00 : f32
    %110 = vector.broadcast %cst_60 : f32 to vector<1x128xf32>
    %111 = arith.addf %110, %109 : vector<1x128xf32>
    %112 = arith.divf %110, %111 : vector<1x128xf32>
    %cst_61 = arith.constant 1.000000e+00 : f32
    %113 = vector.broadcast %cst_61 : f32 to vector<1x128xf32>
    %114 = arith.addf %112, %113 : vector<1x128xf32>
    %115 = vector.broadcast %114 : vector<1x128xf32> to vector<16x128xf32>
    %116 = arith.mulf %93, %115 : vector<16x128xf32>
    %c0_62 = arith.constant 0 : index
    %c0_63 = arith.constant 0 : index
    %117 = vector.load %arg15[%c0_62, %c0_63] : memref<128x128xf32, #tpu.memory_space<vmem>>, vector<128x128xf32>
    %cst_64 = arith.constant dense<0.000000e+00> : vector<16x128xf32>
    %118 = tpu.matmul %116, %117, %cst_64 {dimension_numbers = #tpu.dot_dimension_numbers<[1], [0], [0], [1], [0, 0, 1, 1], [], []>} : vector<16x128xf32>, vector<128x128xf32>, vector<16x128xf32> -> vector<16x128xf32>
    %119 = arith.addf %118, %11 : vector<16x128xf32>
    %cst_65 = arith.constant 0.000000e+00 : f32
    %120 = vector.broadcast %cst_65 : f32 to vector<16x128xf32>
    %121 = arith.maximumf %119, %120 : vector<16x128xf32>
    %c0_66 = arith.constant 0 : index
    %c0_67 = arith.constant 0 : index
    %c0_68 = arith.constant 0 : index
    %122 = vector.load %arg16[%c0_66, %c0_67, %c0_68] : memref<1x16x128xf32, #tpu.memory_space<vmem>>, vector<1x16x128xf32>
    %123 = vector.shape_cast %122 : vector<1x16x128xf32> to vector<16x128xf32>
    %124 = vector.shape_cast %121 : vector<16x128xf32> to vector<1x16x128xf32>
    tpu.vector_store %arg16[%c0_66, %c0_67, %c0_68], %124 {strides = array<i32>} : memref<1x16x128xf32, #tpu.memory_space<vmem>>, vector<1x16x128xf32>,
    return
  }
  func.func @transform_0(%arg0: i32) -> i32 {
    %c0_i32 = arith.constant 0 : i32
    %c0_i32_0 = arith.constant 0 : i32
    return %c0_i32 : i32
  }
  func.func @transform_1(%arg0: i32) -> (i32, i32, i32) {
    %c0_i32 = arith.constant 0 : i32
    %c0_i32_0 = arith.constant 0 : i32
    %c0_i32_1 = arith.constant 0 : i32
    return %arg0, %c0_i32, %c0_i32_0 : i32, i32, i32
  }
  func.func @transform_2(%arg0: i32) -> (i32, i32) {
    %c0_i32 = arith.constant 0 : i32
    %c0_i32_0 = arith.constant 0 : i32
    %c0_i32_1 = arith.constant 0 : i32
    return %c0_i32, %c0_i32_0 : i32, i32
  }
  func.func @transform_3(%arg0: i32) -> (i32, i32) {
    %c0_i32 = arith.constant 0 : i32
    %c0_i32_0 = arith.constant 0 : i32
    %c0_i32_1 = arith.constant 0 : i32
    return %c0_i32, %c0_i32_0 : i32, i32
  }
  func.func @transform_4(%arg0: i32) -> (i32, i32, i32) {
    %c0_i32 = arith.constant 0 : i32
    %c0_i32_0 = arith.constant 0 : i32
    %c0_i32_1 = arith.constant 0 : i32
    %c0_i32_2 = arith.constant 0 : i32
    return %c0_i32, %c0_i32_0, %c0_i32_1 : i32, i32, i32
  }
  func.func @transform_5(%arg0: i32) -> (i32, i32) {
    %c0_i32 = arith.constant 0 : i32
    %c0_i32_0 = arith.constant 0 : i32
    %c0_i32_1 = arith.constant 0 : i32
    return %c0_i32, %c0_i32_0 : i32, i32
  }
  func.func @transform_6(%arg0: i32) -> (i32, i32) {
    %c0_i32 = arith.constant 0 : i32
    %c0_i32_0 = arith.constant 0 : i32
    %c0_i32_1 = arith.constant 0 : i32
    return %c0_i32, %c0_i32_0 : i32, i32
  }
  func.func @transform_7(%arg0: i32) -> (i32, i32) {
    %c0_i32 = arith.constant 0 : i32
    %c0_i32_0 = arith.constant 0 : i32
    %c0_i32_1 = arith.constant 0 : i32
    return %c0_i32, %c0_i32_0 : i32, i32
  }
  func.func @transform_8(%arg0: i32) -> (i32, i32) {
    %c0_i32 = arith.constant 0 : i32
    %c0_i32_0 = arith.constant 0 : i32
    %c0_i32_1 = arith.constant 0 : i32
    return %c0_i32, %c0_i32_0 : i32, i32
  }
  func.func @transform_9(%arg0: i32) -> (i32, i32) {
    %c0_i32 = arith.constant 0 : i32
    %c0_i32_0 = arith.constant 0 : i32
    %c0_i32_1 = arith.constant 0 : i32
    return %c0_i32, %c0_i32_0 : i32, i32
  }
  func.func @transform_10(%arg0: i32) -> (i32, i32) {
    %c0_i32 = arith.constant 0 : i32
    %c0_i32_0 = arith.constant 0 : i32
    %c0_i32_1 = arith.constant 0 : i32
    return %c0_i32, %c0_i32_0 : i32, i32
  }
  func.func @transform_11(%arg0: i32) -> (i32, i32) {
    %c0_i32 = arith.constant 0 : i32
    %c0_i32_0 = arith.constant 0 : i32
    %c0_i32_1 = arith.constant 0 : i32
    return %c0_i32, %c0_i32_0 : i32, i32
  }
  func.func @transform_12(%arg0: i32) -> (i32, i32) {
    %c0_i32 = arith.constant 0 : i32
    %c0_i32_0 = arith.constant 0 : i32
    %c0_i32_1 = arith.constant 0 : i32
    return %c0_i32, %c0_i32_0 : i32, i32
  }
  func.func @transform_13(%arg0: i32) -> (i32, i32) {
    %c0_i32 = arith.constant 0 : i32
    %c0_i32_0 = arith.constant 0 : i32
    %c0_i32_1 = arith.constant 0 : i32
    return %c0_i32, %c0_i32_0 : i32, i32
  }
  func.func @transform_14(%arg0: i32) -> (i32, i32) {
    %c0_i32 = arith.constant 0 : i32
    %c0_i32_0 = arith.constant 0 : i32
    %c0_i32_1 = arith.constant 0 : i32
    return %c0_i32, %c0_i32_0 : i32, i32
  }
  func.func @transform_15(%arg0: i32) -> (i32, i32, i32) {
    %c0_i32 = arith.constant 0 : i32
    %c0_i32_0 = arith.constant 0 : i32
    %c0_i32_1 = arith.constant 0 : i32
    return %arg0, %c0_i32, %c0_i32_0 : i32, i32, i32
  }
}

</mosaic_0001>

<llo_original>
// kernel: _lambda_.1
$region0: #{_lambda_.1}
  #allocation0 [shape = 'u32[]', space=smem, size = 0x4, offset = 0x4, fixed_abs, tag = 'smem constant byte address 0x4 - core index']
  #allocation1 [shape = 'u32[144,128]{1,0:T(1,128)}', space=vmem, size = 0x12000, scoped, tag = 'internal scratch']
  %s0 = inlined_call_operand.vmem [shape: f32[3], index: 0, kind: input, shape index: {}]
  %s1 = inlined_call_operand.vmem [shape: f32[2,16,32], index: 1, kind: input, shape index: {}]
  %s2 = inlined_call_operand.hbm [shape: f32[32,832], index: 2, kind: input, shape index: {}]
  %s3 = inlined_call_operand.hbm [shape: f32[1,832], index: 3, kind: input, shape index: {}]
  %s4 = inlined_call_operand.hbm [shape: f32[3,16,16], index: 4, kind: input, shape index: {}]
  %s5 = inlined_call_operand.hbm [shape: f32[128,256], index: 5, kind: input, shape index: {}]
  %s6 = inlined_call_operand.hbm [shape: f32[16,256], index: 6, kind: input, shape index: {}]
  %s7 = inlined_call_operand.hbm [shape: f32[256,16], index: 7, kind: input, shape index: {}]
  %s8 = inlined_call_operand.vmem [shape: f32[16,16], index: 8, kind: input, shape index: {}]
  %s9 = inlined_call_operand.hbm [shape: f32[128,128], index: 9, kind: input, shape index: {}]
  %s10 = inlined_call_operand.hbm [shape: f32[128,8], index: 10, kind: input, shape index: {}]
  %s11 = inlined_call_operand.vmem [shape: f32[1,8], index: 11, kind: input, shape index: {}]
  %s12 = inlined_call_operand.vmem [shape: f32[8,128], index: 12, kind: input, shape index: {}]
  %s13 = inlined_call_operand.vmem [shape: f32[1,128], index: 13, kind: input, shape index: {}]
  %s14 = inlined_call_operand.vmem [shape: f32[128,128], index: 14, kind: input, shape index: {}]
  %s15 = inlined_call_operand.vmem [shape: f32[2,16,128], index: 15, kind: output, shape index: {}]
  %s16 = sld [smem:[#allocation0]]
  $region129: #{_lambda_.1} parent=0
    _
  %s18 = ssub.s32 1, %s16
  %s19 = scalar_select 0, %s18, %s16
  $region1: #{_lambda_.1} parent=0
    #allocation2 [shape = 'u8[512]{0}', space=smem, size = 0x200, scoped, tag = 'input window, operand 0, single buffered']
    #allocation3 [shape = 's32[2]{0}', space=sflag, size = 0x8, scoped, tag = 'scoped memory for _lambda_.1']
    #allocation4 [shape = 's32[2]{0}', space=sflag, size = 0x8, scoped, tag = 'scoped memory for _lambda_.1']
    #allocation5 [shape = 'u8[114688]{0}', space=vmem, size = 0x1c000, scoped, tag = 'input window, operand 2, single buffered']
    #allocation6 [shape = 'u8[3584]{0}', space=vmem, size = 0x1000, scoped, tag = 'input window, operand 3, single buffered']
    #allocation7 [shape = 's32[1]{0}', space=sflag, size = 0x4, scoped, tag = 'scoped memory for _lambda_.1']
    #allocation8 [shape = 'u8[24576]{0}', space=vmem, size = 0x6000, scoped, tag = 'input window, operand 4, single buffered']
    #allocation9 [shape = 'u8[131072]{0}', space=vmem, size = 0x20000, scoped, tag = 'input window, operand 5, single buffered']
    #allocation10 [shape = 's32[1]{0}', space=sflag, size = 0x4, scoped, tag = 'scoped memory for _lambda_.1']
    #allocation11 [shape = 'u8[16384]{0}', space=vmem, size = 0x4000, scoped, tag = 'input window, operand 6, single buffered']
    #allocation12 [shape = 'u8[131072]{0}', space=vmem, size = 0x20000, scoped, tag = 'input window, operand 7, single buffered']
    #allocation13 [shape = 's32[1]{0}', space=sflag, size = 0x4, scoped, tag = 'scoped memory for _lambda_.1']
    #allocation14 [shape = 'u8[65536]{0}', space=vmem, size = 0x10000, scoped, tag = 'input window, operand 9, single buffered']
    #allocation15 [shape = 'u8[65536]{0}', space=vmem, size = 0x10000, scoped, tag = 'input window, operand 10, single buffered']
    #allocation16 [shape = 's32[1]{0}', space=sflag, size = 0x4, scoped, tag = 'scoped memory for _lambda_.1']
    %20 = vsyncpa [#allocation4], 0
    %21 = vsyncpa [#allocation3], 0
    %22 = vsyncpa [#allocation7], 0
    %23 = vsyncpa [#allocation10], 0
    %24 = vsyncpa [#allocation13], 0
    %25 = vsyncpa [#allocation16], 0
    loop: start=0, step=1, limit=4
    $region2: #{_lambda_.1} parent=1 // loop_pre_header
      _
    $region3: #{_lambda_.1} parent=1 // loop_header
      %s27 = sphi 0, %s31
      %p28 = scmp.ge.s32.totalorder %s27, 4
      %s35 = sphi 0, %s35
      %s37 = sphi 0, %s35
      %s38 = sphi 0, %s37
      %s52 = sphi 0, %s38
      %s58 = sphi 0, %s60
      %s61 = sphi 0, %s58
      %s62 = sphi 0, %s61
      %s78 = sphi 0, %s62
      %s82 = sphi 0, %s82
      %s84 = sphi 0, %s82
      %s85 = sphi 0, %s84
      %s99 = sphi 0, %s85
      %s103 = sphi 0, %s103
      %s105 = sphi 0, %s103
      %s106 = sphi 0, %s105
      %s120 = sphi 0, %s106
      %s124 = sphi 0, %s124
      %s126 = sphi 0, %s124
      %s127 = sphi 0, %s126
      %s141 = sphi 0, %s127
      %s145 = sphi 0, %s145
      %s147 = sphi 0, %s145
      %s148 = sphi 0, %s147
      %s162 = sphi 0, %s148
      %s166 = sphi 0, %s166
      %s168 = sphi 0, %s166
      %s169 = sphi 0, %s168
      %s183 = sphi 0, %s169
      %s187 = sphi 0, %s187
      %s189 = sphi 0, %s187
      %s190 = sphi 0, %s189
      %s204 = sphi 0, %s190
      %s208 = sphi 0, %s208
      %s210 = sphi 0, %s208
      %s211 = sphi 0, %s210
      %s225 = sphi 0, %s211
      %s229 = sphi 0, %s229
      %s231 = sphi 0, %s229
      %s232 = sphi 0, %s231
      %s246 = sphi 0, %s232
      %s250 = sphi 0, %s250
      %s252 = sphi 0, %s250
      %s253 = sphi 0, %s252
      %s267 = sphi 0, %s253
      %s271 = sphi 0, %s271
      %s273 = sphi 0, %s271
      %s274 = sphi 0, %s273
      %s288 = sphi 0, %s274
      %s292 = sphi 0, %s292
      %s294 = sphi 0, %s292
      %s295 = sphi 0, %s294
      %s309 = sphi 0, %s295
      %s313 = sphi 0, %s313
      %s315 = sphi 0, %s313
      %s316 = sphi 0, %s315
      %s330 = sphi 0, %s316
      %s334 = sphi 0, %s334
      %s336 = sphi 0, %s334
      %s337 = sphi 0, %s336
      %s351 = sphi 0, %s337
      %s357 = sphi 0, %s359
      %s360 = sphi 0, %s357
      %s361 = sphi 0, %s360
      %s377 = sphi 0, %s361
    $region4: #{_lambda_.1} parent=1 // loop_header_branch
      %30 = sbr.rel (%p28) target = $region8
    $region5: #{_lambda_.1} parent=1 // loop_body
      %s32 = ssub.s32 %s27, 1
      %s33 = ssub.s32 %s27, 2
      %s34 = sadd.s32 %s27, 1
      %s36 = sadd.s32 %s35, 1
      %p39 = scmp.eq.s32.totalorder %s27, 1
      %p40 = scmp.ne.s32.totalorder %s35, %s37
      %p41 = scmp.eq.s32.totalorder %s27, 0
      %p42 = por %p40, %p41
      %p43 = scmp.ne.s32.totalorder %s35, %s37
      %p44 = scmp.eq.s32.totalorder %s32, 1
      %p45 = por %p43, %p44
      %p46 = scmp.ne.s32.totalorder %s37, %s38
      %p47 = scmp.eq.s32.totalorder %s32, 0
      %p48 = por %p46, %p47
      %p49 = scmp.ne.s32.totalorder %s37, %s38
      %p50 = scmp.eq.s32.totalorder %s33, 1
      %p51 = por %p49, %p50
      %p53 = scmp.ne.s32.totalorder %s38, %s52
      %p54 = scmp.eq.s32.totalorder %s33, 0
      %p55 = por %p53, %p54
      %s56 = ssub.s32 %s27, %s34
      %p57 = scmp.eq.s32.totalorder %s56, 0
      %s59 = sadd.s32 %s58, 1
      %s60 = scalar_select %p57, %s58, %s59
      %p63 = pneg %p57
      %p64 = scmp.eq.s32.totalorder %s27, 1
      %p65 = por %p63, %p64
      %p66 = scmp.ne.s32.totalorder %s58, %s61
      %p67 = scmp.eq.s32.totalorder %s27, 0
      %p68 = por %p66, %p67
      %p69 = scmp.ne.s32.totalorder %s58, %s61
      %p70 = scmp.eq.s32.totalorder %s32, 1
      %p71 = por %p69, %p70
      %p72 = scmp.ne.s32.totalorder %s61, %s62
      %p73 = scmp.eq.s32.totalorder %s32, 0
      %p74 = por %p72, %p73
      %p75 = scmp.ne.s32.totalorder %s61, %s62
      %p76 = scmp.eq.s32.totalorder %s33, 1
      %p77 = por %p75, %p76
      %p79 = scmp.ne.s32.totalorder %s62, %s78
      %p80 = scmp.eq.s32.totalorder %s33, 0
      %p81 = por %p79, %p80
      %s83 = sadd.s32 %s82, 1
      %p86 = scmp.eq.s32.totalorder %s27, 1
      %p87 = scmp.ne.s32.totalorder %s82, %s84
      %p88 = scmp.eq.s32.totalorder %s27, 0
      %p89 = por %p87, %p88
      %p90 = scmp.ne.s32.totalorder %s82, %s84
      %p91 = scmp.eq.s32.totalorder %s32, 1
      %p92 = por %p90, %p91
      %p93 = scmp.ne.s32.totalorder %s84, %s85
      %p94 = scmp.eq.s32.totalorder %s32, 0
      %p95 = por %p93, %p94
      %p96 = scmp.ne.s32.totalorder %s84, %s85
      %p97 = scmp.eq.s32.totalorder %s33, 1
      %p98 = por %p96, %p97
      %p100 = scmp.ne.s32.totalorder %s85, %s99
      %p101 = scmp.eq.s32.totalorder %s33, 0
      %p102 = por %p100, %p101
      %s104 = sadd.s32 %s103, 1
      %p107 = scmp.eq.s32.totalorder %s27, 1
      %p108 = scmp.ne.s32.totalorder %s103, %s105
      %p109 = scmp.eq.s32.totalorder %s27, 0
      %p110 = por %p108, %p109
      %p111 = scmp.ne.s32.totalorder %s103, %s105
      %p112 = scmp.eq.s32.totalorder %s32, 1
      %p113 = por %p111, %p112
      %p114 = scmp.ne.s32.totalorder %s105, %s106
      %p115 = scmp.eq.s32.totalorder %s32, 0
      %p116 = por %p114, %p115
      %p117 = scmp.ne.s32.totalorder %s105, %s106
      %p118 = scmp.eq.s32.totalorder %s33, 1
      %p119 = por %p117, %p118
      %p121 = scmp.ne.s32.totalorder %s106, %s120
      %p122 = scmp.eq.s32.totalorder %s33, 0
      %p123 = por %p121, %p122
      %s125 = sadd.s32 %s124, 1
      %p128 = scmp.eq.s32.totalorder %s27, 1
      %p129 = scmp.ne.s32.totalorder %s124, %s126
      %p130 = scmp.eq.s32.totalorder %s27, 0
      %p131 = por %p129, %p130
      %p132 = scmp.ne.s32.totalorder %s124, %s126
      %p133 = scmp.eq.s32.totalorder %s32, 1
      %p134 = por %p132, %p133
      %p135 = scmp.ne.s32.totalorder %s126, %s127
      %p136 = scmp.eq.s32.totalorder %s32, 0
      %p137 = por %p135, %p136
      %p138 = scmp.ne.s32.totalorder %s126, %s127
      %p139 = scmp.eq.s32.totalorder %s33, 1
      %p140 = por %p138, %p139
      %p142 = scmp.ne.s32.totalorder %s127, %s141
      %p143 = scmp.eq.s32.totalorder %s33, 0
      %p144 = por %p142, %p143
      %s146 = sadd.s32 %s145, 1
      %p149 = scmp.eq.s32.totalorder %s27, 1
      %p150 = scmp.ne.s32.totalorder %s145, %s147
      %p151 = scmp.eq.s32.totalorder %s27, 0
      %p152 = por %p150, %p151
      %p153 = scmp.ne.s32.totalorder %s145, %s147
      %p154 = scmp.eq.s32.totalorder %s32, 1
      %p155 = por %p153, %p154
      %p156 = scmp.ne.s32.totalorder %s147, %s148
      %p157 = scmp.eq.s32.totalorder %s32, 0
      %p158 = por %p156, %p157
      %p159 = scmp.ne.s32.totalorder %s147, %s148
      %p160 = scmp.eq.s32.totalorder %s33, 1
      %p161 = por %p159, %p160
      %p163 = scmp.ne.s32.totalorder %s148, %s162
      %p164 = scmp.eq.s32.totalorder %s33, 0
      %p165 = por %p163, %p164
      %s167 = sadd.s32 %s166, 1
      %p170 = scmp.eq.s32.totalorder %s27, 1
      %p171 = scmp.ne.s32.totalorder %s166, %s168
      %p172 = scmp.eq.s32.totalorder %s27, 0
      %p173 = por %p171, %p172
      %p174 = scmp.ne.s32.totalorder %s166, %s168
      %p175 = scmp.eq.s32.totalorder %s32, 1
      %p176 = por %p174, %p175
      %p177 = scmp.ne.s32.totalorder %s168, %s169
      %p178 = scmp.eq.s32.totalorder %s32, 0
      %p179 = por %p177, %p178
      %p180 = scmp.ne.s32.totalorder %s168, %s169
      %p181 = scmp.eq.s32.totalorder %s33, 1
      %p182 = por %p180, %p181
      %p184 = scmp.ne.s32.totalorder %s169, %s183
      %p185 = scmp.eq.s32.totalorder %s33, 0
      %p186 = por %p184, %p185
      %s188 = sadd.s32 %s187, 1
      %p191 = scmp.eq.s32.totalorder %s27, 1
      %p192 = scmp.ne.s32.totalorder %s187, %s189
      %p193 = scmp.eq.s32.totalorder %s27, 0
      %p194 = por %p192, %p193
      %p195 = scmp.ne.s32.totalorder %s187, %s189
      %p196 = scmp.eq.s32.totalorder %s32, 1
      %p197 = por %p195, %p196
      %p198 = scmp.ne.s32.totalorder %s189, %s190
      %p199 = scmp.eq.s32.totalorder %s32, 0
      %p200 = por %p198, %p199
      %p201 = scmp.ne.s32.totalorder %s189, %s190
      %p202 = scmp.eq.s32.totalorder %s33, 1
      %p203 = por %p201, %p202
      %p205 = scmp.ne.s32.totalorder %s190, %s204
      %p206 = scmp.eq.s32.totalorder %s33, 0
      %p207 = por %p205, %p206
      %s209 = sadd.s32 %s208, 1
      %p212 = scmp.eq.s32.totalorder %s27, 1
      %p213 = scmp.ne.s32.totalorder %s208, %s210
      %p214 = scmp.eq.s32.totalorder %s27, 0
      %p215 = por %p213, %p214
      %p216 = scmp.ne.s32.totalorder %s208, %s210
      %p217 = scmp.eq.s32.totalorder %s32, 1
      %p218 = por %p216, %p217
      %p219 = scmp.ne.s32.totalorder %s210, %s211
      %p220 = scmp.eq.s32.totalorder %s32, 0
      %p221 = por %p219, %p220
      %p222 = scmp.ne.s32.totalorder %s210, %s211
      %p223 = scmp.eq.s32.totalorder %s33, 1
      %p224 = por %p222, %p223
      %p226 = scmp.ne.s32.totalorder %s211, %s225
      %p227 = scmp.eq.s32.totalorder %s33, 0
      %p228 = por %p226, %p227
      %s230 = sadd.s32 %s229, 1
      %p233 = scmp.eq.s32.totalorder %s27, 1
      %p234 = scmp.ne.s32.totalorder %s229, %s231
      %p235 = scmp.eq.s32.totalorder %s27, 0
      %p236 = por %p234, %p235
      %p237 = scmp.ne.s32.totalorder %s229, %s231
      %p238 = scmp.eq.s32.totalorder %s32, 1
      %p239 = por %p237, %p238
      %p240 = scmp.ne.s32.totalorder %s231, %s232
      %p241 = scmp.eq.s32.totalorder %s32, 0
      %p242 = por %p240, %p241
      %p243 = scmp.ne.s32.totalorder %s231, %s232
      %p244 = scmp.eq.s32.totalorder %s33, 1
      %p245 = por %p243, %p244
      %p247 = scmp.ne.s32.totalorder %s232, %s246
      %p248 = scmp.eq.s32.totalorder %s33, 0
      %p249 = por %p247, %p248
      %s251 = sadd.s32 %s250, 1
      %p254 = scmp.eq.s32.totalorder %s27, 1
      %p255 = scmp.ne.s32.totalorder %s250, %s252
      %p256 = scmp.eq.s32.totalorder %s27, 0
      %p257 = por %p255, %p256
      %p258 = scmp.ne.s32.totalorder %s250, %s252
      %p259 = scmp.eq.s32.totalorder %s32, 1
      %p260 = por %p258, %p259
      %p261 = scmp.ne.s32.totalorder %s252, %s253
      %p262 = scmp.eq.s32.totalorder %s32, 0
      %p263 = por %p261, %p262
      %p264 = scmp.ne.s32.totalorder %s252, %s253
      %p265 = scmp.eq.s32.totalorder %s33, 1
      %p266 = por %p264, %p265
      %p268 = scmp.ne.s32.totalorder %s253, %s267
      %p269 = scmp.eq.s32.totalorder %s33, 0
      %p270 = por %p268, %p269
      %s272 = sadd.s32 %s271, 1
      %p275 = scmp.eq.s32.totalorder %s27, 1
      %p276 = scmp.ne.s32.totalorder %s271, %s273
      %p277 = scmp.eq.s32.totalorder %s27, 0
      %p278 = por %p276, %p277
      %p279 = scmp.ne.s32.totalorder %s271, %s273
      %p280 = scmp.eq.s32.totalorder %s32, 1
      %p281 = por %p279, %p280
      %p282 = scmp.ne.s32.totalorder %s273, %s274
      %p283 = scmp.eq.s32.totalorder %s32, 0
      %p284 = por %p282, %p283
      %p285 = scmp.ne.s32.totalorder %s273, %s274
      %p286 = scmp.eq.s32.totalorder %s33, 1
      %p287 = por %p285, %p286
      %p289 = scmp.ne.s32.totalorder %s274, %s288
      %p290 = scmp.eq.s32.totalorder %s33, 0
      %p291 = por %p289, %p290
      %s293 = sadd.s32 %s292, 1
      %p296 = scmp.eq.s32.totalorder %s27, 1
      %p297 = scmp.ne.s32.totalorder %s292, %s294
      %p298 = scmp.eq.s32.totalorder %s27, 0
      %p299 = por %p297, %p298
      %p300 = scmp.ne.s32.totalorder %s292, %s294
      %p301 = scmp.eq.s32.totalorder %s32, 1
      %p302 = por %p300, %p301
      %p303 = scmp.ne.s32.totalorder %s294, %s295
      %p304 = scmp.eq.s32.totalorder %s32, 0
      %p305 = por %p303, %p304
      %p306 = scmp.ne.s32.totalorder %s294, %s295
      %p307 = scmp.eq.s32.totalorder %s33, 1
      %p308 = por %p306, %p307
      %p310 = scmp.ne.s32.totalorder %s295, %s309
      %p311 = scmp.eq.s32.totalorder %s33, 0
      %p312 = por %p310, %p311
      %s314 = sadd.s32 %s313, 1
      %p317 = scmp.eq.s32.totalorder %s27, 1
      %p318 = scmp.ne.s32.totalorder %s313, %s315
      %p319 = scmp.eq.s32.totalorder %s27, 0
      %p320 = por %p318, %p319
      %p321 = scmp.ne.s32.totalorder %s313, %s315
      %p322 = scmp.eq.s32.totalorder %s32, 1
      %p323 = por %p321, %p322
      %p324 = scmp.ne.s32.totalorder %s315, %s316
      %p325 = scmp.eq.s32.totalorder %s32, 0
      %p326 = por %p324, %p325
      %p327 = scmp.ne.s32.totalorder %s315, %s316
      %p328 = scmp.eq.s32.totalorder %s33, 1
      %p329 = por %p327, %p328
      %p331 = scmp.ne.s32.totalorder %s316, %s330
      %p332 = scmp.eq.s32.totalorder %s33, 0
      %p333 = por %p331, %p332
      %s335 = sadd.s32 %s334, 1
      %p338 = scmp.eq.s32.totalorder %s27, 1
      %p339 = scmp.ne.s32.totalorder %s334, %s336
      %p340 = scmp.eq.s32.totalorder %s27, 0
      %p341 = por %p339, %p340
      %p342 = scmp.ne.s32.totalorder %s334, %s336
      %p343 = scmp.eq.s32.totalorder %s32, 1
      %p344 = por %p342, %p343
      %p345 = scmp.ne.s32.totalorder %s336, %s337
      %p346 = scmp.eq.s32.totalorder %s32, 0
      %p347 = por %p345, %p346
      %p348 = scmp.ne.s32.totalorder %s336, %s337
      %p349 = scmp.eq.s32.totalorder %s33, 1
      %p350 = por %p348, %p349
      %p352 = scmp.ne.s32.totalorder %s337, %s351
      %p353 = scmp.eq.s32.totalorder %s33, 0
      %p354 = por %p352, %p353
      %s355 = ssub.s32 %s27, %s34
      %p356 = scmp.eq.s32.totalorder %s355, 0
      %s358 = sadd.s32 %s357, 1
      %s359 = scalar_select %p356, %s357, %s358
      %p362 = pneg %p356
      %p363 = scmp.eq.s32.totalorder %s27, 1
      %p364 = por %p362, %p363
      %p365 = scmp.ne.s32.totalorder %s357, %s360
      %p366 = scmp.eq.s32.totalorder %s27, 0
      %p367 = por %p365, %p366
      %p368 = scmp.ne.s32.totalorder %s357, %s360
      %p369 = scmp.eq.s32.totalorder %s32, 1
      %p370 = por %p368, %p369
      %p371 = scmp.ne.s32.totalorder %s360, %s361
      %p372 = scmp.eq.s32.totalorder %s32, 0
      %p373 = por %p371, %p372
      %p374 = scmp.ne.s32.totalorder %s360, %s361
      %p375 = scmp.eq.s32.totalorder %s33, 1
      %p376 = por %p374, %p375
      %p378 = scmp.ne.s32.totalorder %s361, %s377
      %p379 = scmp.eq.s32.totalorder %s33, 0
      %p380 = por %p378, %p379
      %p381 = scmp.le.s32.totalorder 1, %s27
      %p382 = scmp.lt.s32.totalorder %s27, 3
      %p383 = pnand %p381, %p382
      %p384 = pneg %p383
      // Predicated region
      $region9: #{_lambda_.1} parent=5 // pred_check
        _
      $region10: #{_lambda_.1} parent=5 // pred_check_branch
        %386 = sbr.rel (%p383) target = $region12
      $region11: #{_lambda_.1} parent=5 // pred_region
        %s387 = ssub.s32 %s27, 1
        // Predicated region
        $region13: #{_lambda_.1} parent=11 // pred_check
          %p388 = pneg %p48
        $region14: #{_lambda_.1} parent=11 // pred_check_branch
          %390 = sbr.rel (%p388) target = $region16
        $region15: #{_lambda_.1} parent=11 // pred_region
          %s392 = ssub.s32 16, 16
          %393 = vsyncadd [#allocation4], %s392
          %s395 = sshll.u32 %s0, 4
          %s396 = int_to_ptr.vmem [resolvable:$true] %s395
          %398 = dma.vmem_to_smem %s396, 16, [#allocation2], [#allocation4]
        $region16: #{_lambda_.1} parent=11 // pred_fallthru
          _
        // Predicated region
        $region17: #{_lambda_.1} parent=11 // pred_check
          %p399 = pneg %p95
        $region18: #{_lambda_.1} parent=11 // pred_check_branch
          %401 = sbr.rel (%p399) target = $region20
        $region19: #{_lambda_.1} parent=11 // pred_region
          %s403 = ssub.s32 3584, 3584
          %404 = vsyncadd [#allocation3], %s403
          %s405 = sshll.u32 [#allocation5], 4
          %s406 = int_to_ptr.vmem [resolvable:$true] %s405
          %411 = dma.hbm_to_vmem [thread:$0]  %s2, 3584, %s406, [#allocation3], 896, 896, 56
        $region20: #{_lambda_.1} parent=11 // pred_fallthru
          _
        // Predicated region
        $region21: #{_lambda_.1} parent=11 // pred_check
          %p412 = pneg %p116
        $region22: #{_lambda_.1} parent=11 // pred_check_branch
          %414 = sbr.rel (%p412) target = $region24
        $region23: #{_lambda_.1} parent=11 // pred_region
          %s416 = ssub.s32 112, 112
          %417 = vsyncadd [#allocation7], %s416
          %s419 = sshll.u32 [#allocation6], 4
          %s420 = int_to_ptr.vmem [resolvable:$true] %s419
          %422 = dma.hbm_to_vmem [thread:$0]  %s3, 112, %s420, [#allocation7]
        $region24: #{_lambda_.1} parent=11 // pred_fallthru
          _
        // Predicated region
        $region25: #{_lambda_.1} parent=11 // pred_check
          %p423 = pneg %p137
        $region26: #{_lambda_.1} parent=11 // pred_check_branch
          %425 = sbr.rel (%p423) target = $region28
        $region27: #{_lambda_.1} parent=11 // pred_region
          %s427 = ssub.s32 768, 768
          %428 = vsyncadd [#allocation7], %s427
          %s429 = sshll.u32 [#allocation8], 4
          %s430 = int_to_ptr.vmem [resolvable:$true] %s429
          %435 = dma.hbm_to_vmem [thread:$0]  %s4, 768, %s430, [#allocation7], 128, 128, 8
        $region28: #{_lambda_.1} parent=11 // pred_fallthru
          _
        // Predicated region
        $region29: #{_lambda_.1} parent=11 // pred_check
          %p436 = pneg %p158
        $region30: #{_lambda_.1} parent=11 // pred_check_branch
          %438 = sbr.rel (%p436) target = $region32
        $region31: #{_lambda_.1} parent=11 // pred_region
          %s440 = ssub.s32 4096, 4096
          %441 = vsyncadd [#allocation10], %s440
          %s442 = sshll.u32 [#allocation9], 4
          %s443 = int_to_ptr.vmem [resolvable:$true] %s442
          %448 = dma.hbm_to_vmem [thread:$0]  %s5, 4096, %s443, [#allocation10], 256, 256, 16
        $region32: #{_lambda_.1} parent=11 // pred_fallthru
          _
        // Predicated region
        $region33: #{_lambda_.1} parent=11 // pred_check
          %p449 = pneg %p179
        $region34: #{_lambda_.1} parent=11 // pred_check_branch
          %451 = sbr.rel (%p449) target = $region36
        $region35: #{_lambda_.1} parent=11 // pred_region
          %s453 = ssub.s32 512, 512
          %454 = vsyncadd [#allocation10], %s453
          %s455 = sshll.u32 [#allocation11], 4
          %s456 = int_to_ptr.vmem [resolvable:$true] %s455
          %461 = dma.hbm_to_vmem [thread:$0]  %s6, 512, %s456, [#allocation10], 256, 256, 16
        $region36: #{_lambda_.1} parent=11 // pred_fallthru
          _
        // Predicated region
        $region37: #{_lambda_.1} parent=11 // pred_check
          %p462 = pneg %p200
        $region38: #{_lambda_.1} parent=11 // pred_check_branch
          %464 = sbr.rel (%p462) target = $region40
        $region39: #{_lambda_.1} parent=11 // pred_region
          %s466 = ssub.s32 4096, 4096
          %467 = vsyncadd [#allocation13], %s466
          %s468 = sshll.u32 [#allocation12], 4
          %s469 = int_to_ptr.vmem [resolvable:$true] %s468
          %474 = dma.hbm_to_vmem [thread:$0]  %s7, 4096, %s469, [#allocation13], 128, 128, 8
        $region40: #{_lambda_.1} parent=11 // pred_fallthru
          _
        // Predicated region
        $region41: #{_lambda_.1} parent=11 // pred_check
          %p475 = pneg %p221
        $region42: #{_lambda_.1} parent=11 // pred_check_branch
          %477 = sbr.rel (%p475) target = $region44
        $region43: #{_lambda_.1} parent=11 // pred_region
          _
        $region44: #{_lambda_.1} parent=11 // pred_fallthru
          _
        // Predicated region
        $region45: #{_lambda_.1} parent=11 // pred_check
          %p478 = pneg %p242
        $region46: #{_lambda_.1} parent=11 // pred_check_branch
          %480 = sbr.rel (%p478) target = $region48
        $region47: #{_lambda_.1} parent=11 // pred_region
          %s482 = ssub.s32 2048, 2048
          %483 = vsyncadd [#allocation13], %s482
          %s484 = sshll.u32 [#allocation14], 4
          %s485 = int_to_ptr.vmem [resolvable:$true] %s484
          %490 = dma.hbm_to_vmem [thread:$0]  %s9, 2048, %s485, [#allocation13], 128, 128, 8
        $region48: #{_lambda_.1} parent=11 // pred_fallthru
          _
        // Predicated region
        $region49: #{_lambda_.1} parent=11 // pred_check
          %p491 = pneg %p263
        $region50: #{_lambda_.1} parent=11 // pred_check_branch
          %493 = sbr.rel (%p491) target = $region52
        $region51: #{_lambda_.1} parent=11 // pred_region
          %s495 = ssub.s32 2048, 2048
          %496 = vsyncadd [#allocation16], %s495
          %s497 = sshll.u32 [#allocation15], 4
          %s498 = int_to_ptr.vmem [resolvable:$true] %s497
          %503 = dma.hbm_to_vmem [thread:$0]  %s10, 2048, %s498, [#allocation16], 128, 128, 8
        $region52: #{_lambda_.1} parent=11 // pred_fallthru
          _
        // Predicated region
        $region53: #{_lambda_.1} parent=11 // pred_check
          %p504 = pneg %p284
        $region54: #{_lambda_.1} parent=11 // pred_check_branch
          %506 = sbr.rel (%p504) target = $region56
        $region55: #{_lambda_.1} parent=11 // pred_region
          _
        $region56: #{_lambda_.1} parent=11 // pred_fallthru
          _
        // Predicated region
        $region57: #{_lambda_.1} parent=11 // pred_check
          %p507 = pneg %p305
        $region58: #{_lambda_.1} parent=11 // pred_check_branch
          %509 = sbr.rel (%p507) target = $region60
        $region59: #{_lambda_.1} parent=11 // pred_region
          _
        $region60: #{_lambda_.1} parent=11 // pred_fallthru
          _
        // Predicated region
        $region61: #{_lambda_.1} parent=11 // pred_check
          %p510 = pneg %p326
        $region62: #{_lambda_.1} parent=11 // pred_check_branch
          %512 = sbr.rel (%p510) target = $region64
        $region63: #{_lambda_.1} parent=11 // pred_region
          _
        $region64: #{_lambda_.1} parent=11 // pred_fallthru
          _
        // Predicated region
        $region65: #{_lambda_.1} parent=11 // pred_check
          %p513 = pneg %p347
        $region66: #{_lambda_.1} parent=11 // pred_check_branch
          %515 = sbr.rel (%p513) target = $region68
        $region67: #{_lambda_.1} parent=11 // pred_region
          _
        $region68: #{_lambda_.1} parent=11 // pred_fallthru
          _
      $region12: #{_lambda_.1} parent=5 // pred_fallthru
        _
      %p516 = scmp.lt.s32.totalorder %s27, 2
      // Predicated region
      $region69: #{_lambda_.1} parent=5 // pred_check
        %p517 = pneg %p516
      $region70: #{_lambda_.1} parent=5 // pred_check_branch
        %519 = sbr.rel (%p517) target = $region72
      $region71: #{_lambda_.1} parent=5 // pred_region
        // Predicated region
        $region73: #{_lambda_.1} parent=71 // pred_check
          %p520 = pneg %p68
        $region74: #{_lambda_.1} parent=71 // pred_check_branch
          %522 = sbr.rel (%p520) target = $region76
        $region75: #{_lambda_.1} parent=71 // pred_region
          %p523 = scmp.lt.s32.totalorder %s27, 1
          %s524 = scalar_select %p523, %s27, 1
          %s525 = smul.addr %s524, 2
          %s526 = smul.addr %s525, 8
          %s527 = scalar_lea.vmem %s1, %s526
        $region76: #{_lambda_.1} parent=71 // pred_fallthru
          _
      $region72: #{_lambda_.1} parent=5 // pred_fallthru
        _
      %p528 = scmp.le.s32.totalorder 1, %s27
      %p529 = scmp.lt.s32.totalorder %s27, 3
      %p530 = pnand %p528, %p529
      %p531 = pneg %p530
      // Predicated region
      $region77: #{_lambda_.1} parent=5 // pred_check
        _
      $region78: #{_lambda_.1} parent=5 // pred_check_branch
        %533 = sbr.rel (%p530) target = $region80
      $region79: #{_lambda_.1} parent=5 // pred_region
        %s534 = ssub.s32 %s27, 1
        // Predicated region
        $region81: #{_lambda_.1} parent=79 // pred_check
          %p535 = pneg %p48
        $region82: #{_lambda_.1} parent=79 // pred_check_branch
          %537 = sbr.rel (%p535) target = $region84
        $region83: #{_lambda_.1} parent=79 // pred_region
          %538 = dma.done [#allocation4], 16
        $region84: #{_lambda_.1} parent=79 // pred_fallthru
          _
        // Predicated region
        $region85: #{_lambda_.1} parent=79 // pred_check
          %p539 = pneg %p95
        $region86: #{_lambda_.1} parent=79 // pred_check_branch
          %541 = sbr.rel (%p539) target = $region88
        $region87: #{_lambda_.1} parent=79 // pred_region
          %542 = dma.done [#allocation3], 3584
        $region88: #{_lambda_.1} parent=79 // pred_fallthru
          _
        // Predicated region
        $region89: #{_lambda_.1} parent=79 // pred_check
          %p543 = pneg %p116
        $region90: #{_lambda_.1} parent=79 // pred_check_branch
          %545 = sbr.rel (%p543) target = $region92
        $region91: #{_lambda_.1} parent=79 // pred_region
          %546 = dma.done [#allocation7], 112
        $region92: #{_lambda_.1} parent=79 // pred_fallthru
          _
        // Predicated region
        $region93: #{_lambda_.1} parent=79 // pred_check
          %p547 = pneg %p137
        $region94: #{_lambda_.1} parent=79 // pred_check_branch
          %549 = sbr.rel (%p547) target = $region96
        $region95: #{_lambda_.1} parent=79 // pred_region
          %550 = dma.done [#allocation7], 768
        $region96: #{_lambda_.1} parent=79 // pred_fallthru
          _
        // Predicated region
        $region97: #{_lambda_.1} parent=79 // pred_check
          %p551 = pneg %p158
        $region98: #{_lambda_.1} parent=79 // pred_check_branch
          %553 = sbr.rel (%p551) target = $region100
        $region99: #{_lambda_.1} parent=79 // pred_region
          %554 = dma.done [#allocation10], 4096
        $region100: #{_lambda_.1} parent=79 // pred_fallthru
          _
        // Predicated region
        $region101: #{_lambda_.1} parent=79 // pred_check
          %p555 = pneg %p179
        $region102: #{_lambda_.1} parent=79 // pred_check_branch
          %557 = sbr.rel (%p555) target = $region104
        $region103: #{_lambda_.1} parent=79 // pred_region
          %558 = dma.done [#allocation10], 512
        $region104: #{_lambda_.1} parent=79 // pred_fallthru
          _
        // Predicated region
        $region105: #{_lambda_.1} parent=79 // pred_check
          %p559 = pneg %p200
        $region106: #{_lambda_.1} parent=79 // pred_check_branch
          %561 = sbr.rel (%p559) target = $region108
        $region107: #{_lambda_.1} parent=79 // pred_region
          %562 = dma.done [#allocation13], 4096
        $region108: #{_lambda_.1} parent=79 // pred_fallthru
          _
        // Predicated region
        $region109: #{_lambda_.1} parent=79 // pred_check
          %p563 = pneg %p242
        $region110: #{_lambda_.1} parent=79 // pred_check_branch
          %565 = sbr.rel (%p563) target = $region112
        $region111: #{_lambda_.1} parent=79 // pred_region
          %566 = dma.done [#allocation13], 2048
        $region112: #{_lambda_.1} parent=79 // pred_fallthru
          _
        // Predicated region
        $region113: #{_lambda_.1} parent=79 // pred_check
          %p567 = pneg %p263
        $region114: #{_lambda_.1} parent=79 // pred_check_branch
          %569 = sbr.rel (%p567) target = $region116
        $region115: #{_lambda_.1} parent=79 // pred_region
          %570 = dma.done [#allocation16], 2048
        $region116: #{_lambda_.1} parent=79 // pred_fallthru
          _
        %571 = sfence
        %p572 = pneg %p48
        %p573 = pneg %p45
        %p574 = scmp.lt.s32.totalorder %s32, 1
        %s575 = scalar_select %p574, %s32, 1
        %s576 = smul.addr %s575, 2
        %s577 = smul.addr %s576, 8
        %s578 = scalar_lea.vmem %s1, %s577
        %p579 = pneg %p74
        %p580 = pneg %p71
        %p581 = pneg %p95
        %p582 = pneg %p92
        %p583 = pneg %p116
        %p584 = pneg %p113
        %p585 = pneg %p137
        %p586 = pneg %p134
        %p587 = pneg %p158
        %p588 = pneg %p155
        %p589 = pneg %p179
        %p590 = pneg %p176
        %p591 = pneg %p200
        %p592 = pneg %p197
        %p593 = pneg %p221
        %p594 = pneg %p218
        %p595 = pneg %p242
        %p596 = pneg %p239
        %p597 = pneg %p263
        %p598 = pneg %p260
        %p599 = pneg %p284
        %p600 = pneg %p281
        %p601 = pneg %p305
        %p602 = pneg %p302
        %p603 = pneg %p326
        %p604 = pneg %p323
        %p605 = pneg %p347
        %p606 = pneg %p344
        %p607 = pneg %p373
        %p608 = pneg %p370
        %p609 = scmp.lt.s32.totalorder %s32, 1
        %s610 = scalar_select %p609, %s32, 1
        %s611 = smul.addr %s610, 2
        %s612 = smul.addr %s611, 8
        %s613 = scalar_lea.vmem %s15, %s612
        %p614 = scmp.lt.s32.totalorder %s32, 1
        %s615 = scalar_select %p614, %s32, 1
        %s616 = smul.addr %s615, 2
        %s617 = smul.addr %s616, 8
        %s618 = scalar_lea.vmem %s1, %s617
        %p619 = scmp.lt.s32.totalorder %s32, 1
        %s620 = scalar_select %p619, %s32, 1
        %s621 = smul.addr %s620, 2
        %s622 = smul.addr %s621, 8
        %s623 = scalar_lea.vmem %s15, %s622
        %v624 = vld [vmem:[%s618] sm:$0xff]
        %v625 = vld [vmem:[%s618 + $0x8] sm:$0xff]
        %s626 = sld [smem:[#allocation2]]
        %s627 = sld [smem:[#allocation2 + $0x1]]
        %s628 = sld [smem:[#allocation2 + $0x2]]
        %v629 = vld [vmem:[#allocation5] sm:$0xff]
        %v630 = vld [vmem:[#allocation5 + $0x8] sm:$0xff]
        %v631 = vld [vmem:[#allocation5 + $0x10] sm:$0xff]
        %v632 = vld [vmem:[#allocation5 + $0x18] sm:$0xff]
        %v633 = vld [vmem:[#allocation5 + $0x20] sm:$0xff]
        %v634 = vld [vmem:[#allocation5 + $0x28] sm:$0xff]
        %v635 = vld [vmem:[#allocation5 + $0x30] sm:$0xff]
        %v636 = vld [vmem:[#allocation5 + $0x38] sm:$0xff]
        %v637 = vld [vmem:[#allocation5 + $0x40] sm:$0xff]
        %v638 = vld [vmem:[#allocation5 + $0x48] sm:$0xff]
        %v639 = vld [vmem:[#allocation5 + $0x50] sm:$0xff]
        %v640 = vld [vmem:[#allocation5 + $0x58] sm:$0xff]
        %v641 = vld [vmem:[#allocation5 + $0x60] sm:$0xff]
        %v642 = vld [vmem:[#allocation5 + $0x68] sm:$0xff]
        %v643 = vld [vmem:[#allocation5 + $0x70] sm:$0xff]
        %v644 = vld [vmem:[#allocation5 + $0x78] sm:$0xff]
        %v645 = vld [vmem:[#allocation5 + $0x80] sm:$0xff]
        %v646 = vld [vmem:[#allocation5 + $0x88] sm:$0xff]
        %v647 = vld [vmem:[#allocation5 + $0x90] sm:$0xff]
        %v648 = vld [vmem:[#allocation5 + $0x98] sm:$0xff]
        %v649 = vld [vmem:[#allocation5 + $0xa0] sm:$0xff]
        %v650 = vld [vmem:[#allocation5 + $0xa8] sm:$0xff]
        %v651 = vld [vmem:[#allocation5 + $0xb0] sm:$0xff]
        %v652 = vld [vmem:[#allocation5 + $0xb8] sm:$0xff]
        %v653 = vld [vmem:[#allocation5 + $0xc0] sm:$0xff]
        %v654 = vld [vmem:[#allocation5 + $0xc8] sm:$0xff]
        %v655 = vld [vmem:[#allocation5 + $0xd0] sm:$0xff]
        %v656 = vld [vmem:[#allocation5 + $0xd8] sm:$0xff]
        %v657 = vld [vmem:[#allocation6] sm:$0x7f]
        %v659 = vlaneseq
        %v660 = vshrl.u32 %v659, 7
        %v661 = vsub.s32 0, %v660
        %v662 = vrot.slane %v657, %v661
        %v663 = vlaneseq
        %v664 = vshrl.u32 %v663, 7
        %v665 = vsub.s32 1, %v664
        %v666 = vrot.slane %v657, %v665
        %v667 = vlaneseq
        %v668 = vshrl.u32 %v667, 7
        %v669 = vsub.s32 2, %v668
        %v670 = vrot.slane %v657, %v669
        %v671 = vlaneseq
        %v672 = vshrl.u32 %v671, 7
        %v673 = vsub.s32 3, %v672
        %v674 = vrot.slane %v657, %v673
        %v675 = vlaneseq
        %v676 = vshrl.u32 %v675, 7
        %v677 = vsub.s32 4, %v676
        %v678 = vrot.slane %v657, %v677
        %v679 = vlaneseq
        %v680 = vshrl.u32 %v679, 7
        %v681 = vsub.s32 5, %v680
        %v682 = vrot.slane %v657, %v681
        %v683 = vlaneseq
        %v684 = vshrl.u32 %v683, 7
        %v685 = vsub.s32 6, %v684
        %v686 = vrot.slane %v657, %v685
        %vm694 = vcmask 261120
        %v696 = vsel %vm694, %v624, 0
        %v699 = vsel %vm694, %v625, 0
        %701 = vmatprep.subr.mxu0 %v630
        %702 = vmatpush1.msra.mxu0 %v629
        %703 = vmatprep.subr.mxu0 %v637
        %704 = vmatpush1.msra.mxu0 %v636
        %705 = vmatprep.subr.mxu0 %v644
        %706 = vmatpush1.msra.mxu0 %v643
        %707 = vmatprep.subr.mxu0 %v651
        %708 = vmatpush1.msra.mxu0 %v650
        %709 = vmatprep.subr.mxu0 0.0
        %710 = vmatpush1.msra.mxu0 0.0
        %711 = vmatprep.subr.mxu0 0.0
        %712 = vmatpush1.msra.mxu0 0.0
        %713 = vmatprep.subr.mxu0 0.0
        %714 = vmatpush1.msra.mxu0 0.0
        %715 = vmatprep.subr.mxu0 0.0
        %716 = vmatpush1.msra.mxu0 0.0
        %717 = vmatprep.subr.mxu0 0.0
        %718 = vmatpush1.msra.mxu0 0.0
        %719 = vmatprep.subr.mxu0 0.0
        %720 = vmatpush1.msra.mxu0 0.0
        %721 = vmatprep.subr.mxu0 0.0
        %722 = vmatpush1.msra.mxu0 0.0
        %723 = vmatprep.subr.mxu0 0.0
        %724 = vmatpush1.msra.mxu0 0.0
        %725 = vmatprep.subr.mxu0 0.0
        %726 = vmatpush1.msra.mxu0 0.0
        %727 = vmatprep.subr.mxu0 0.0
        %728 = vmatpush1.msra.mxu0 0.0
        %729 = vmatprep.subr.mxu0 0.0
        %730 = vmatpush1.msra.mxu0 0.0
        %731 = vmatprep.subr.mxu0 0.0
        %732 = vmatpush1.msra.mxu0 0.0
        %733 = vmatprep.subr.mxu0 0.0
        %734 = vmatpush1.msra.mxu0 0.0
        %735 = vmatprep.subr.mxu0 0.0
        %736 = vmatpush1.msra.mxu0 0.0
        %737 = vmatprep.subr.mxu0 0.0
        %738 = vmatpush1.msra.mxu0 0.0
        %739 = vmatprep.subr.mxu0 0.0
        %740 = vmatpush1.msra.mxu0 0.0
        %741 = vmatprep.subr.mxu0 0.0
        %742 = vmatpush1.msra.mxu0 0.0
        %743 = vmatprep.subr.mxu0 0.0
        %744 = vmatpush1.msra.mxu0 0.0
        %745 = vmatprep.subr.mxu0 0.0
        %746 = vmatpush1.msra.mxu0 0.0
        %747 = vmatprep.subr.mxu0 0.0
        %748 = vmatpush1.msra.mxu0 0.0
        %749 = vmatprep.subr.mxu0 0.0
        %750 = vmatpush1.msra.mxu0 0.0
        %751 = vmatprep.subr.mxu0 0.0
        %752 = vmatpush1.msra.mxu0 0.0
        %753 = vmatprep.subr.mxu0 0.0
        %754 = vmatpush1.msra.mxu0 0.0
        %755 = vmatprep.subr.mxu0 0.0
        %756 = vmatpush1.msra.mxu0 0.0
        %757 = vmatprep.subr.mxu0 0.0
        %758 = vmatpush1.msra.mxu0 0.0
        %759 = vmatprep.subr.mxu0 0.0
        %760 = vmatpush1.msra.mxu0 0.0
        %761 = vmatprep.subr.mxu0 0.0
        %762 = vmatpush1.msra.mxu0 0.0
        %763 = vmatprep.subr.mxu0 0.0
        %764 = vmatpush1.msra.mxu0 0.0
        %765 = vmatprep.mubr.f32.mxu0 0.0
        %766 = vmatmul.mubr.f32.gmra.mrb[0].mxu0 %v696
        %v767 = vpop.f32.mrb[0].mxu0
        %v768 = vadd.f32 %v662, %v767
        %v769 = vpop.f32.mrb[0].mxu0
        %v770 = vadd.f32 %v666, %v769
        %771 = vmatprep.mubr.f32.mxu0 0.0
        %772 = vmatmul.mubr.f32.gmra.mrb[0].mxu0 %v699
        %v773 = vpop.f32.mrb[0].mxu0
        %v774 = vadd.f32 %v662, %v773
        %v775 = vpop.f32.mrb[0].mxu0
        %v776 = vadd.f32 %v666, %v775
        %777 = vdwg.mxu0
        %778 = vmatprep.subr.mxu0 %v632
        %779 = vmatpush1.msra.mxu0 %v631
        %780 = vmatprep.subr.mxu0 %v639
        %781 = vmatpush1.msra.mxu0 %v638
        %782 = vmatprep.subr.mxu0 %v646
        %783 = vmatpush1.msra.mxu0 %v645
        %784 = vmatprep.subr.mxu0 %v653
        %785 = vmatpush1.msra.mxu0 %v652
        %786 = vmatprep.subr.mxu0 0.0
        %787 = vmatpush1.msra.mxu0 0.0
        %788 = vmatprep.subr.mxu0 0.0
        %789 = vmatpush1.msra.mxu0 0.0
        %790 = vmatprep.subr.mxu0 0.0
        %791 = vmatpush1.msra.mxu0 0.0
        %792 = vmatprep.subr.mxu0 0.0
        %793 = vmatpush1.msra.mxu0 0.0
        %794 = vmatprep.subr.mxu0 0.0
        %795 = vmatpush1.msra.mxu0 0.0
        %796 = vmatprep.subr.mxu0 0.0
        %797 = vmatpush1.msra.mxu0 0.0
        %798 = vmatprep.subr.mxu0 0.0
        %799 = vmatpush1.msra.mxu0 0.0
        %800 = vmatprep.subr.mxu0 0.0
        %801 = vmatpush1.msra.mxu0 0.0
        %802 = vmatprep.subr.mxu0 0.0
        %803 = vmatpush1.msra.mxu0 0.0
        %804 = vmatprep.subr.mxu0 0.0
        %805 = vmatpush1.msra.mxu0 0.0
        %806 = vmatprep.subr.mxu0 0.0
        %807 = vmatpush1.msra.mxu0 0.0
        %808 = vmatprep.subr.mxu0 0.0
        %809 = vmatpush1.msra.mxu0 0.0
        %810 = vmatprep.subr.mxu0 0.0
        %811 = vmatpush1.msra.mxu0 0.0
        %812 = vmatprep.subr.mxu0 0.0
        %813 = vmatpush1.msra.mxu0 0.0
        %814 = vmatprep.subr.mxu0 0.0
        %815 = vmatpush1.msra.mxu0 0.0
        %816 = vmatprep.subr.mxu0 0.0
        %817 = vmatpush1.msra.mxu0 0.0
        %818 = vmatprep.subr.mxu0 0.0
        %819 = vmatpush1.msra.mxu0 0.0
        %820 = vmatprep.subr.mxu0 0.0
        %821 = vmatpush1.msra.mxu0 0.0
        %822 = vmatprep.subr.mxu0 0.0
        %823 = vmatpush1.msra.mxu0 0.0
        %824 = vmatprep.subr.mxu0 0.0
        %825 = vmatpush1.msra.mxu0 0.0
        %826 = vmatprep.subr.mxu0 0.0
        %827 = vmatpush1.msra.mxu0 0.0
        %828 = vmatprep.subr.mxu0 0.0
        %829 = vmatpush1.msra.mxu0 0.0
        %830 = vmatprep.subr.mxu0 0.0
        %831 = vmatpush1.msra.mxu0 0.0
        %832 = vmatprep.subr.mxu0 0.0
        %833 = vmatpush1.msra.mxu0 0.0
        %834 = vmatprep.subr.mxu0 0.0
        %835 = vmatpush1.msra.mxu0 0.0
        %836 = vmatprep.subr.mxu0 0.0
        %837 = vmatpush1.msra.mxu0 0.0
        %838 = vmatprep.subr.mxu0 0.0
        %839 = vmatpush1.msra.mxu0 0.0
        %840 = vmatprep.subr.mxu0 0.0
        %841 = vmatpush1.msra.mxu0 0.0
        %842 = vmatprep.mubr.f32.mxu0 0.0
        %843 = vmatmul.mubr.f32.gmra.mrb[0].mxu0 %v696
        %v844 = vpop.f32.mrb[0].mxu0
        %v845 = vadd.f32 %v670, %v844
        %v846 = vpop.f32.mrb[0].mxu0
        %v847 = vadd.f32 %v674, %v846
        %848 = vmatprep.mubr.f32.mxu0 0.0
        %849 = vmatmul.mubr.f32.gmra.mrb[0].mxu0 %v699
        %v850 = vpop.f32.mrb[0].mxu0
        %v851 = vadd.f32 %v670, %v850
        %v852 = vpop.f32.mrb[0].mxu0
        %v853 = vadd.f32 %v674, %v852
        %854 = vdwg.mxu0
        %855 = vmatprep.subr.mxu0 %v634
        %856 = vmatpush1.msra.mxu0 %v633
        %857 = vmatprep.subr.mxu0 %v641
        %858 = vmatpush1.msra.mxu0 %v640
        %859 = vmatprep.subr.mxu0 %v648
        %860 = vmatpush1.msra.mxu0 %v647
        %861 = vmatprep.subr.mxu0 %v655
        %862 = vmatpush1.msra.mxu0 %v654
        %863 = vmatprep.subr.mxu0 0.0
        %864 = vmatpush1.msra.mxu0 0.0
        %865 = vmatprep.subr.mxu0 0.0
        %866 = vmatpush1.msra.mxu0 0.0
        %867 = vmatprep.subr.mxu0 0.0
        %868 = vmatpush1.msra.mxu0 0.0
        %869 = vmatprep.subr.mxu0 0.0
        %870 = vmatpush1.msra.mxu0 0.0
        %871 = vmatprep.subr.mxu0 0.0
        %872 = vmatpush1.msra.mxu0 0.0
        %873 = vmatprep.subr.mxu0 0.0
        %874 = vmatpush1.msra.mxu0 0.0
        %875 = vmatprep.subr.mxu0 0.0
        %876 = vmatpush1.msra.mxu0 0.0
        %877 = vmatprep.subr.mxu0 0.0
        %878 = vmatpush1.msra.mxu0 0.0
        %879 = vmatprep.subr.mxu0 0.0
        %880 = vmatpush1.msra.mxu0 0.0
        %881 = vmatprep.subr.mxu0 0.0
        %882 = vmatpush1.msra.mxu0 0.0
        %883 = vmatprep.subr.mxu0 0.0
        %884 = vmatpush1.msra.mxu0 0.0
        %885 = vmatprep.subr.mxu0 0.0
        %886 = vmatpush1.msra.mxu0 0.0
        %887 = vmatprep.subr.mxu0 0.0
        %888 = vmatpush1.msra.mxu0 0.0
        %889 = vmatprep.subr.mxu0 0.0
        %890 = vmatpush1.msra.mxu0 0.0
        %891 = vmatprep.subr.mxu0 0.0
        %892 = vmatpush1.msra.mxu0 0.0
        %893 = vmatprep.subr.mxu0 0.0
        %894 = vmatpush1.msra.mxu0 0.0
        %895 = vmatprep.subr.mxu0 0.0
        %896 = vmatpush1.msra.mxu0 0.0
        %897 = vmatprep.subr.mxu0 0.0
        %898 = vmatpush1.msra.mxu0 0.0
        %899 = vmatprep.subr.mxu0 0.0
        %900 = vmatpush1.msra.mxu0 0.0
        %901 = vmatprep.subr.mxu0 0.0
        %902 = vmatpush1.msra.mxu0 0.0
        %903 = vmatprep.subr.mxu0 0.0
        %904 = vmatpush1.msra.mxu0 0.0
        %905 = vmatprep.subr.mxu0 0.0
        %906 = vmatpush1.msra.mxu0 0.0
        %907 = vmatprep.subr.mxu0 0.0
        %908 = vmatpush1.msra.mxu0 0.0
        %909 = vmatprep.subr.mxu0 0.0
        %910 = vmatpush1.msra.mxu0 0.0
        %911 = vmatprep.subr.mxu0 0.0
        %912 = vmatpush1.msra.mxu0 0.0
        %913 = vmatprep.subr.mxu0 0.0
        %914 = vmatpush1.msra.mxu0 0.0
        %915 = vmatprep.subr.mxu0 0.0
        %916 = vmatpush1.msra.mxu0 0.0
        %917 = vmatprep.subr.mxu0 0.0
        %918 = vmatpush1.msra.mxu0 0.0
        %919 = vmatprep.mubr.f32.mxu0 0.0
        %920 = vmatmul.mubr.f32.gmra.mrb[0].mxu0 %v696
        %v921 = vpop.f32.mrb[0].mxu0
        %v922 = vadd.f32 %v678, %v921
        %v923 = vpop.f32.mrb[0].mxu0
        %v924 = vadd.f32 %v682, %v923
        %925 = vmatprep.mubr.f32.mxu0 0.0
        %926 = vmatmul.mubr.f32.gmra.mrb[0].mxu0 %v699
        %v927 = vpop.f32.mrb[0].mxu0
        %v928 = vadd.f32 %v678, %v927
        %v929 = vpop.f32.mrb[0].mxu0
        %v930 = vadd.f32 %v682, %v929
        %931 = vdwg.mxu0
        %932 = vmatprep.subr.mxu0 0.0
        %933 = vmatpush1.msra.mxu0 %v635
        %934 = vmatprep.subr.mxu0 0.0
        %935 = vmatpush1.msra.mxu0 %v642
        %936 = vmatprep.subr.mxu0 0.0
        %937 = vmatpush1.msra.mxu0 %v649
        %938 = vmatprep.subr.mxu0 0.0
        %939 = vmatpush1.msra.mxu0 %v656
        %940 = vmatprep.subr.mxu0 0.0
        %941 = vmatpush1.msra.mxu0 0.0
        %942 = vmatprep.subr.mxu0 0.0
        %943 = vmatpush1.msra.mxu0 0.0
        %944 = vmatprep.subr.mxu0 0.0
        %945 = vmatpush1.msra.mxu0 0.0
        %946 = vmatprep.subr.mxu0 0.0
        %947 = vmatpush1.msra.mxu0 0.0
        %948 = vmatprep.subr.mxu0 0.0
        %949 = vmatpush1.msra.mxu0 0.0
        %950 = vmatprep.subr.mxu0 0.0
        %951 = vmatpush1.msra.mxu0 0.0
        %952 = vmatprep.subr.mxu0 0.0
        %953 = vmatpush1.msra.mxu0 0.0
        %954 = vmatprep.subr.mxu0 0.0
        %955 = vmatpush1.msra.mxu0 0.0
        %956 = vmatprep.subr.mxu0 0.0
        %957 = vmatpush1.msra.mxu0 0.0
        %958 = vmatprep.subr.mxu0 0.0
        %959 = vmatpush1.msra.mxu0 0.0
        %960 = vmatprep.subr.mxu0 0.0
        %961 = vmatpush1.msra.mxu0 0.0
        %962 = vmatprep.subr.mxu0 0.0
        %963 = vmatpush1.msra.mxu0 0.0
        %964 = vmatprep.subr.mxu0 0.0
        %965 = vmatpush1.msra.mxu0 0.0
        %966 = vmatprep.subr.mxu0 0.0
        %967 = vmatpush1.msra.mxu0 0.0
        %968 = vmatprep.subr.mxu0 0.0
        %969 = vmatpush1.msra.mxu0 0.0
        %970 = vmatprep.subr.mxu0 0.0
        %971 = vmatpush1.msra.mxu0 0.0
        %972 = vmatprep.subr.mxu0 0.0
        %973 = vmatpush1.msra.mxu0 0.0
        %974 = vmatprep.subr.mxu0 0.0
        %975 = vmatpush1.msra.mxu0 0.0
        %976 = vmatprep.subr.mxu0 0.0
        %977 = vmatpush1.msra.mxu0 0.0
        %978 = vmatprep.subr.mxu0 0.0
        %979 = vmatpush1.msra.mxu0 0.0
        %980 = vmatprep.subr.mxu0 0.0
        %981 = vmatpush1.msra.mxu0 0.0
        %982 = vmatprep.subr.mxu0 0.0
        %983 = vmatpush1.msra.mxu0 0.0
        %984 = vmatprep.subr.mxu0 0.0
        %985 = vmatpush1.msra.mxu0 0.0
        %986 = vmatprep.subr.mxu0 0.0
        %987 = vmatpush1.msra.mxu0 0.0
        %988 = vmatprep.subr.mxu0 0.0
        %989 = vmatpush1.msra.mxu0 0.0
        %990 = vmatprep.subr.mxu0 0.0
        %991 = vmatpush1.msra.mxu0 0.0
        %992 = vmatprep.subr.mxu0 0.0
        %993 = vmatpush1.msra.mxu0 0.0
        %994 = vmatprep.subr.mxu0 0.0
        %995 = vmatpush1.msra.mxu0 0.0
        %996 = vmatprep.mubr.f32.mxu0 0.0
        %997 = vmatmul.mubr.f32.gmra.mrb[0].mxu0 %v696
        %v998 = vpop.f32.mrb[0].mxu0
        %v999 = vadd.f32 %v686, %v998
        %v1000 = vpop.f32.mrb[0].mxu0
        %1001 = vmatprep.mubr.f32.mxu0 0.0
        %1002 = vmatmul.mubr.f32.gmra.mrb[0].mxu0 %v699
        %v1003 = vpop.f32.mrb[0].mxu0
        %v1004 = vadd.f32 %v686, %v1003
        %v1005 = vpop.f32.mrb[0].mxu0
        %1006 = vdwg.mxu0
        %1009 = vrot.lane.b32.xlu0 %v924, 96
        %v1010 = vpop.permute.xlu0 %1009
        %1011 = vrot.lane.b32.xlu0 %v930, 96
        %v1012 = vpop.permute.xlu0 %1011
        %v1013 = vsel %vm694, %v1010, 0
        %v1015 = vsel %vm694, %v1012, 0
        %v1017 = vsel %vm694, %v924, 0
        %v1019 = vsel %vm694, %v930, 0
        %1021 = vmatprep.subr.mxu0 0.0
        %1022 = vmatpush1.xpose.msra.mxu0 %v1017
        %1023 = vmatprep.subr.mxu0 0.0
        %1024 = vmatpush1.xpose.msra.mxu0 %v1019
        %1025 = vmatprep.subr.mxu0 0.0
        %1026 = vmatpush1.xpose.msra.mxu0 0.0
        %1027 = vmatprep.subr.mxu0 0.0
        %1028 = vmatpush1.xpose.msra.mxu0 0.0
        %1029 = vmatprep.subr.mxu0 0.0
        %1030 = vmatpush1.xpose.msra.mxu0 0.0
        %1031 = vmatprep.subr.mxu0 0.0
        %1032 = vmatpush1.xpose.msra.mxu0 0.0
        %1033 = vmatprep.subr.mxu0 0.0
        %1034 = vmatpush1.xpose.msra.mxu0 0.0
        %1035 = vmatprep.subr.mxu0 0.0
        %1036 = vmatpush1.xpose.msra.mxu0 0.0
        %1037 = vmatprep.subr.mxu0 0.0
        %1038 = vmatpush1.xpose.msra.mxu0 0.0
        %1039 = vmatprep.subr.mxu0 0.0
        %1040 = vmatpush1.xpose.msra.mxu0 0.0
        %1041 = vmatprep.subr.mxu0 0.0
        %1042 = vmatpush1.xpose.msra.mxu0 0.0
        %1043 = vmatprep.subr.mxu0 0.0
        %1044 = vmatpush1.xpose.msra.mxu0 0.0
        %1045 = vmatprep.subr.mxu0 0.0
        %1046 = vmatpush1.xpose.msra.mxu0 0.0
        %1047 = vmatprep.subr.mxu0 0.0
        %1048 = vmatpush1.xpose.msra.mxu0 0.0
        %1049 = vmatprep.subr.mxu0 0.0
        %1050 = vmatpush1.xpose.msra.mxu0 0.0
        %1051 = vmatprep.subr.mxu0 0.0
        %1052 = vmatpush1.xpose.msra.mxu0 0.0
        %1053 = vmatprep.subr.mxu0 0.0
        %1054 = vmatpush1.xpose.msra.mxu0 0.0
        %1055 = vmatprep.subr.mxu0 0.0
        %1056 = vmatpush1.xpose.msra.mxu0 0.0
        %1057 = vmatprep.subr.mxu0 0.0
        %1058 = vmatpush1.xpose.msra.mxu0 0.0
        %1059 = vmatprep.subr.mxu0 0.0
        %1060 = vmatpush1.xpose.msra.mxu0 0.0
        %1061 = vmatprep.subr.mxu0 0.0
        %1062 = vmatpush1.xpose.msra.mxu0 0.0
        %1063 = vmatprep.subr.mxu0 0.0
        %1064 = vmatpush1.xpose.msra.mxu0 0.0
        %1065 = vmatprep.subr.mxu0 0.0
        %1066 = vmatpush1.xpose.msra.mxu0 0.0
        %1067 = vmatprep.subr.mxu0 0.0
        %1068 = vmatpush1.xpose.msra.mxu0 0.0
        %1069 = vmatprep.subr.mxu0 0.0
        %1070 = vmatpush1.xpose.msra.mxu0 0.0
        %1071 = vmatprep.subr.mxu0 0.0
        %1072 = vmatpush1.xpose.msra.mxu0 0.0
        %1073 = vmatprep.subr.mxu0 0.0
        %1074 = vmatpush1.xpose.msra.mxu0 0.0
        %1075 = vmatprep.subr.mxu0 0.0
        %1076 = vmatpush1.xpose.msra.mxu0 0.0
        %1077 = vmatprep.subr.mxu0 0.0
        %1078 = vmatpush1.xpose.msra.mxu0 0.0
        %1079 = vmatprep.subr.mxu0 0.0
        %1080 = vmatpush1.xpose.msra.mxu0 0.0
        %1081 = vmatprep.subr.mxu0 0.0
        %1082 = vmatpush1.xpose.msra.mxu0 0.0
        %1083 = vmatprep.subr.mxu0 0.0
        %1084 = vmatpush1.xpose.msra.mxu0 0.0
        %1085 = vmatprep.mubr.f32.mxu0 0.0
        %1086 = vmatmul.mubr.f32.gmra.mrb[0].mxu0 %v1013
        %v1087 = vpop.f32.mrb[0].mxu0
        %v1088 = vadd.f32 0.0, %v1087
        %v1089 = vpop.f32.mrb[0].mxu0
        %1090 = vmatprep.mubr.f32.mxu0 0.0
        %1091 = vmatmul.mubr.f32.gmra.mrb[0].mxu0 %v1015
        %v1092 = vpop.f32.mrb[0].mxu0
        %v1093 = vadd.f32 0.0, %v1092
        %v1094 = vpop.f32.mrb[0].mxu0
        %1095 = vdwg.mxu0
        %v1096 = vmul.f32 %v1088, 0.03125
        %v1097 = vmul.f32 %v1093, 0.03125
        %v1098 = vtanh.pop %v1096
        %v1099 = vtanh.pop %v1097
        %v1100 = vld [vmem:[#allocation8] sm:$0xff]
        %v1101 = vld [vmem:[#allocation8 + $0x8] sm:$0xff]
        %v1102 = vstv %s626
        %v1103 = vmul.f32 %v1102, %v1098
        %v1104 = vmul.f32 %v1102, %v1099
        %v1105 = vadd.f32 %v1100, %v1103
        %v1106 = vadd.f32 %v1101, %v1104
        %1107 = vrot.lane.b32.xlu0 %v924, 32
        %v1108 = vpop.permute.xlu0 %1107
        %1109 = vrot.lane.b32.xlu0 %v930, 32
        %v1110 = vpop.permute.xlu0 %1109
        %1111 = vrot.lane.b32.xlu0 %v924, 64
        %v1112 = vpop.permute.xlu0 %1111
        %1113 = vrot.lane.b32.xlu0 %v930, 64
        %v1114 = vpop.permute.xlu0 %1113
        %v1115 = vsel %vm694, %v1108, 0
        %v1117 = vsel %vm694, %v1110, 0
        %v1119 = vsel %vm694, %v1112, 0
        %v1121 = vsel %vm694, %v1114, 0
        %1123 = vmatprep.subr.mxu0 0.0
        %1124 = vmatpush1.xpose.msra.mxu0 %v1119
        %1125 = vmatprep.subr.mxu0 0.0
        %1126 = vmatpush1.xpose.msra.mxu0 %v1121
        %1127 = vmatprep.subr.mxu0 0.0
        %1128 = vmatpush1.xpose.msra.mxu0 0.0
        %1129 = vmatprep.subr.mxu0 0.0
        %1130 = vmatpush1.xpose.msra.mxu0 0.0
        %1131 = vmatprep.subr.mxu0 0.0
        %1132 = vmatpush1.xpose.msra.mxu0 0.0
        %1133 = vmatprep.subr.mxu0 0.0
        %1134 = vmatpush1.xpose.msra.mxu0 0.0
        %1135 = vmatprep.subr.mxu0 0.0
        %1136 = vmatpush1.xpose.msra.mxu0 0.0
        %1137 = vmatprep.subr.mxu0 0.0
        %1138 = vmatpush1.xpose.msra.mxu0 0.0
        %1139 = vmatprep.subr.mxu0 0.0
        %1140 = vmatpush1.xpose.msra.mxu0 0.0
        %1141 = vmatprep.subr.mxu0 0.0
        %1142 = vmatpush1.xpose.msra.mxu0 0.0
        %1143 = vmatprep.subr.mxu0 0.0
        %1144 = vmatpush1.xpose.msra.mxu0 0.0
        %1145 = vmatprep.subr.mxu0 0.0
        %1146 = vmatpush1.xpose.msra.mxu0 0.0
        %1147 = vmatprep.subr.mxu0 0.0
        %1148 = vmatpush1.xpose.msra.mxu0 0.0
        %1149 = vmatprep.subr.mxu0 0.0
        %1150 = vmatpush1.xpose.msra.mxu0 0.0
        %1151 = vmatprep.subr.mxu0 0.0
        %1152 = vmatpush1.xpose.msra.mxu0 0.0
        %1153 = vmatprep.subr.mxu0 0.0
        %1154 = vmatpush1.xpose.msra.mxu0 0.0
        %1155 = vmatprep.subr.mxu0 0.0
        %1156 = vmatpush1.xpose.msra.mxu0 0.0
        %1157 = vmatprep.subr.mxu0 0.0
        %1158 = vmatpush1.xpose.msra.mxu0 0.0
        %1159 = vmatprep.subr.mxu0 0.0
        %1160 = vmatpush1.xpose.msra.mxu0 0.0
        %1161 = vmatprep.subr.mxu0 0.0
        %1162 = vmatpush1.xpose.msra.mxu0 0.0
        %1163 = vmatprep.subr.mxu0 0.0
        %1164 = vmatpush1.xpose.msra.mxu0 0.0
        %1165 = vmatprep.subr.mxu0 0.0
        %1166 = vmatpush1.xpose.msra.mxu0 0.0
        %1167 = vmatprep.subr.mxu0 0.0
        %1168 = vmatpush1.xpose.msra.mxu0 0.0
        %1169 = vmatprep.subr.mxu0 0.0
        %1170 = vmatpush1.xpose.msra.mxu0 0.0
        %1171 = vmatprep.subr.mxu0 0.0
        %1172 = vmatpush1.xpose.msra.mxu0 0.0
        %1173 = vmatprep.subr.mxu0 0.0
        %1174 = vmatpush1.xpose.msra.mxu0 0.0
        %1175 = vmatprep.subr.mxu0 0.0
        %1176 = vmatpush1.xpose.msra.mxu0 0.0
        %1177 = vmatprep.subr.mxu0 0.0
        %1178 = vmatpush1.xpose.msra.mxu0 0.0
        %1179 = vmatprep.subr.mxu0 0.0
        %1180 = vmatpush1.xpose.msra.mxu0 0.0
        %1181 = vmatprep.subr.mxu0 0.0
        %1182 = vmatpush1.xpose.msra.mxu0 0.0
        %1183 = vmatprep.subr.mxu0 0.0
        %1184 = vmatpush1.xpose.msra.mxu0 0.0
        %1185 = vmatprep.subr.mxu0 0.0
        %1186 = vmatpush1.xpose.msra.mxu0 0.0
        %1187 = vmatprep.mubr.f32.mxu0 0.0
        %1188 = vmatmul.mubr.f32.gmra.mrb[0].mxu0 %v1115
        %v1189 = vpop.f32.mrb[0].mxu0
        %v1190 = vadd.f32 0.0, %v1189
        %v1191 = vpop.f32.mrb[0].mxu0
        %1192 = vmatprep.mubr.f32.mxu0 0.0
        %1193 = vmatmul.mubr.f32.gmra.mrb[0].mxu0 %v1117
        %v1194 = vpop.f32.mrb[0].mxu0
        %v1195 = vadd.f32 0.0, %v1194
        %v1196 = vpop.f32.mrb[0].mxu0
        %1197 = vdwg.mxu0
        %v1198 = vmul.f32 %v1190, 0.03125
        %v1199 = vmul.f32 %v1195, 0.03125
        %v1200 = vtanh.pop %v1198
        %v1201 = vtanh.pop %v1199
        %s1202 = scalar_lea.vmem [#allocation8], 16
        %v1203 = vld [vmem:[%s1202] sm:$0xff]
        %v1204 = vld [vmem:[%s1202 + $0x8] sm:$0xff]
        %v1205 = vmul.f32 %v1102, %v1200
        %v1206 = vmul.f32 %v1102, %v1201
        %v1207 = vadd.f32 %v1203, %v1205
        %v1208 = vadd.f32 %v1204, %v1206
        %vm1209 = vcmask 130048
        %v1211 = vsel %vm1209, %v1207, 0
        %v1214 = vsel %vm1209, %v1208, 0
        %1216 = vmatprep.subr.mxu0 0.0
        %1217 = vmatpush1.msra.mxu0 %v847
        %1218 = vmatprep.subr.mxu0 0.0
        %1219 = vmatpush1.msra.mxu0 %v853
        %1220 = vmatprep.subr.mxu0 0.0
        %1221 = vmatpush1.msra.mxu0 0.0
        %1222 = vmatprep.subr.mxu0 0.0
        %1223 = vmatpush1.msra.mxu0 0.0
        %1224 = vmatprep.subr.mxu0 0.0
        %1225 = vmatpush1.msra.mxu0 0.0
        %1226 = vmatprep.subr.mxu0 0.0
        %1227 = vmatpush1.msra.mxu0 0.0
        %1228 = vmatprep.subr.mxu0 0.0
        %1229 = vmatpush1.msra.mxu0 0.0
        %1230 = vmatprep.subr.mxu0 0.0
        %1231 = vmatpush1.msra.mxu0 0.0
        %1232 = vmatprep.subr.mxu0 0.0
        %1233 = vmatpush1.msra.mxu0 0.0
        %1234 = vmatprep.subr.mxu0 0.0
        %1235 = vmatpush1.msra.mxu0 0.0
        %1236 = vmatprep.subr.mxu0 0.0
        %1237 = vmatpush1.msra.mxu0 0.0
        %1238 = vmatprep.subr.mxu0 0.0
        %1239 = vmatpush1.msra.mxu0 0.0
        %1240 = vmatprep.subr.mxu0 0.0
        %1241 = vmatpush1.msra.mxu0 0.0
        %1242 = vmatprep.subr.mxu0 0.0
        %1243 = vmatpush1.msra.mxu0 0.0
        %1244 = vmatprep.subr.mxu0 0.0
        %1245 = vmatpush1.msra.mxu0 0.0
        %1246 = vmatprep.subr.mxu0 0.0
        %1247 = vmatpush1.msra.mxu0 0.0
        %1248 = vmatprep.subr.mxu0 0.0
        %1249 = vmatpush1.msra.mxu0 0.0
        %1250 = vmatprep.subr.mxu0 0.0
        %1251 = vmatpush1.msra.mxu0 0.0
        %1252 = vmatprep.subr.mxu0 0.0
        %1253 = vmatpush1.msra.mxu0 0.0
        %1254 = vmatprep.subr.mxu0 0.0
        %1255 = vmatpush1.msra.mxu0 0.0
        %1256 = vmatprep.subr.mxu0 0.0
        %1257 = vmatpush1.msra.mxu0 0.0
        %1258 = vmatprep.subr.mxu0 0.0
        %1259 = vmatpush1.msra.mxu0 0.0
        %1260 = vmatprep.subr.mxu0 0.0
        %1261 = vmatpush1.msra.mxu0 0.0
        %1262 = vmatprep.subr.mxu0 0.0
        %1263 = vmatpush1.msra.mxu0 0.0
        %1264 = vmatprep.subr.mxu0 0.0
        %1265 = vmatpush1.msra.mxu0 0.0
        %1266 = vmatprep.subr.mxu0 0.0
        %1267 = vmatpush1.msra.mxu0 0.0
        %1268 = vmatprep.subr.mxu0 0.0
        %1269 = vmatpush1.msra.mxu0 0.0
        %1270 = vmatprep.subr.mxu0 0.0
        %1271 = vmatpush1.msra.mxu0 0.0
        %1272 = vmatprep.subr.mxu0 0.0
        %1273 = vmatpush1.msra.mxu0 0.0
        %1274 = vmatprep.subr.mxu0 0.0
        %1275 = vmatpush1.msra.mxu0 0.0
        %1276 = vmatprep.subr.mxu0 0.0
        %1277 = vmatpush1.msra.mxu0 0.0
        %1278 = vmatprep.subr.mxu0 0.0
        %1279 = vmatpush1.msra.mxu0 0.0
        %1280 = vmatprep.mubr.f32.mxu0 0.0
        %1281 = vmatmul.mubr.f32.gmra.mrb[0].mxu0 %v1211
        %v1282 = vpop.f32.mrb[0].mxu0
        %v1283 = vadd.f32 0.0, %v1282
        %v1284 = vpop.f32.mrb[0].mxu0
        %1285 = vmatprep.mubr.f32.mxu0 0.0
        %1286 = vmatmul.mubr.f32.gmra.mrb[0].mxu0 %v1214
        %v1287 = vpop.f32.mrb[0].mxu0
        %v1288 = vadd.f32 0.0, %v1287
        %v1289 = vpop.f32.mrb[0].mxu0
        %1290 = vdwg.mxu0
        %v1292 = vsel %vm1209, %v1105, 0
        %v1295 = vsel %vm1209, %v1106, 0
        %1297 = vmatprep.subr.mxu0 0.0
        %1298 = vmatpush1.msra.mxu0 %v845
        %1299 = vmatprep.subr.mxu0 0.0
        %1300 = vmatpush1.msra.mxu0 %v851
        %1301 = vmatprep.subr.mxu0 0.0
        %1302 = vmatpush1.msra.mxu0 0.0
        %1303 = vmatprep.subr.mxu0 0.0
        %1304 = vmatpush1.msra.mxu0 0.0
        %1305 = vmatprep.subr.mxu0 0.0
        %1306 = vmatpush1.msra.mxu0 0.0
        %1307 = vmatprep.subr.mxu0 0.0
        %1308 = vmatpush1.msra.mxu0 0.0
        %1309 = vmatprep.subr.mxu0 0.0
        %1310 = vmatpush1.msra.mxu0 0.0
        %1311 = vmatprep.subr.mxu0 0.0
        %1312 = vmatpush1.msra.mxu0 0.0
        %1313 = vmatprep.subr.mxu0 0.0
        %1314 = vmatpush1.msra.mxu0 0.0
        %1315 = vmatprep.subr.mxu0 0.0
        %1316 = vmatpush1.msra.mxu0 0.0
        %1317 = vmatprep.subr.mxu0 0.0
        %1318 = vmatpush1.msra.mxu0 0.0
        %1319 = vmatprep.subr.mxu0 0.0
        %1320 = vmatpush1.msra.mxu0 0.0
        %1321 = vmatprep.subr.mxu0 0.0
        %1322 = vmatpush1.msra.mxu0 0.0
        %1323 = vmatprep.subr.mxu0 0.0
        %1324 = vmatpush1.msra.mxu0 0.0
        %1325 = vmatprep.subr.mxu0 0.0
        %1326 = vmatpush1.msra.mxu0 0.0
        %1327 = vmatprep.subr.mxu0 0.0
        %1328 = vmatpush1.msra.mxu0 0.0
        %1329 = vmatprep.subr.mxu0 0.0
        %1330 = vmatpush1.msra.mxu0 0.0
        %1331 = vmatprep.subr.mxu0 0.0
        %1332 = vmatpush1.msra.mxu0 0.0
        %1333 = vmatprep.subr.mxu0 0.0
        %1334 = vmatpush1.msra.mxu0 0.0
        %1335 = vmatprep.subr.mxu0 0.0
        %1336 = vmatpush1.msra.mxu0 0.0
        %1337 = vmatprep.subr.mxu0 0.0
        %1338 = vmatpush1.msra.mxu0 0.0
        %1339 = vmatprep.subr.mxu0 0.0
        %1340 = vmatpush1.msra.mxu0 0.0
        %1341 = vmatprep.subr.mxu0 0.0
        %1342 = vmatpush1.msra.mxu0 0.0
        %1343 = vmatprep.subr.mxu0 0.0
        %1344 = vmatpush1.msra.mxu0 0.0
        %1345 = vmatprep.subr.mxu0 0.0
        %1346 = vmatpush1.msra.mxu0 0.0
        %1347 = vmatprep.subr.mxu0 0.0
        %1348 = vmatpush1.msra.mxu0 0.0
        %1349 = vmatprep.subr.mxu0 0.0
        %1350 = vmatpush1.msra.mxu0 0.0
        %1351 = vmatprep.subr.mxu0 0.0
        %1352 = vmatpush1.msra.mxu0 0.0
        %1353 = vmatprep.subr.mxu0 0.0
        %1354 = vmatpush1.msra.mxu0 0.0
        %1355 = vmatprep.subr.mxu0 0.0
        %1356 = vmatpush1.msra.mxu0 0.0
        %1357 = vmatprep.subr.mxu0 0.0
        %1358 = vmatpush1.msra.mxu0 0.0
        %1359 = vmatprep.subr.mxu0 0.0
        %1360 = vmatpush1.msra.mxu0 0.0
        %1361 = vmatprep.mubr.f32.mxu0 0.0
        %1362 = vmatmul.mubr.f32.gmra.mrb[0].mxu0 %v1292
        %v1363 = vpop.f32.mrb[0].mxu0
        %v1364 = vadd.f32 %v1283, %v1363
        %v1365 = vpop.f32.mrb[0].mxu0
        %1366 = vmatprep.mubr.f32.mxu0 0.0
        %1367 = vmatmul.mubr.f32.gmra.mrb[0].mxu0 %v1295
        %v1368 = vpop.f32.mrb[0].mxu0
        %v1369 = vadd.f32 %v1288, %v1368
        %v1370 = vpop.f32.mrb[0].mxu0
        %1371 = vdwg.mxu0
        %1374 = vrot.lane.b32.xlu0 %v999, 96
        %v1375 = vpop.permute.xlu0 %1374
        %1376 = vrot.lane.b32.xlu0 %v1004, 96
        %v1377 = vpop.permute.xlu0 %1376
        %v1378 = vsel %vm694, %v1375, 0
        %v1380 = vsel %vm694, %v1377, 0
        %v1382 = vsel %vm694, %v999, 0
        %v1384 = vsel %vm694, %v1004, 0
        %1386 = vmatprep.subr.mxu0 0.0
        %1387 = vmatpush1.xpose.msra.mxu0 %v1382
        %1388 = vmatprep.subr.mxu0 0.0
        %1389 = vmatpush1.xpose.msra.mxu0 %v1384
        %1390 = vmatprep.subr.mxu0 0.0
        %1391 = vmatpush1.xpose.msra.mxu0 0.0
        %1392 = vmatprep.subr.mxu0 0.0
        %1393 = vmatpush1.xpose.msra.mxu0 0.0
        %1394 = vmatprep.subr.mxu0 0.0
        %1395 = vmatpush1.xpose.msra.mxu0 0.0
        %1396 = vmatprep.subr.mxu0 0.0
        %1397 = vmatpush1.xpose.msra.mxu0 0.0
        %1398 = vmatprep.subr.mxu0 0.0
        %1399 = vmatpush1.xpose.msra.mxu0 0.0
        %1400 = vmatprep.subr.mxu0 0.0
        %1401 = vmatpush1.xpose.msra.mxu0 0.0
        %1402 = vmatprep.subr.mxu0 0.0
        %1403 = vmatpush1.xpose.msra.mxu0 0.0
        %1404 = vmatprep.subr.mxu0 0.0
        %1405 = vmatpush1.xpose.msra.mxu0 0.0
        %1406 = vmatprep.subr.mxu0 0.0
        %1407 = vmatpush1.xpose.msra.mxu0 0.0
        %1408 = vmatprep.subr.mxu0 0.0
        %1409 = vmatpush1.xpose.msra.mxu0 0.0
        %1410 = vmatprep.subr.mxu0 0.0
        %1411 = vmatpush1.xpose.msra.mxu0 0.0
        %1412 = vmatprep.subr.mxu0 0.0
        %1413 = vmatpush1.xpose.msra.mxu0 0.0
        %1414 = vmatprep.subr.mxu0 0.0
        %1415 = vmatpush1.xpose.msra.mxu0 0.0
        %1416 = vmatprep.subr.mxu0 0.0
        %1417 = vmatpush1.xpose.msra.mxu0 0.0
        %1418 = vmatprep.subr.mxu0 0.0
        %1419 = vmatpush1.xpose.msra.mxu0 0.0
        %1420 = vmatprep.subr.mxu0 0.0
        %1421 = vmatpush1.xpose.msra.mxu0 0.0
        %1422 = vmatprep.subr.mxu0 0.0
        %1423 = vmatpush1.xpose.msra.mxu0 0.0
        %1424 = vmatprep.subr.mxu0 0.0
        %1425 = vmatpush1.xpose.msra.mxu0 0.0
        %1426 = vmatprep.subr.mxu0 0.0
        %1427 = vmatpush1.xpose.msra.mxu0 0.0
        %1428 = vmatprep.subr.mxu0 0.0
        %1429 = vmatpush1.xpose.msra.mxu0 0.0
        %1430 = vmatprep.subr.mxu0 0.0
        %1431 = vmatpush1.xpose.msra.mxu0 0.0
        %1432 = vmatprep.subr.mxu0 0.0
        %1433 = vmatpush1.xpose.msra.mxu0 0.0
        %1434 = vmatprep.subr.mxu0 0.0
        %1435 = vmatpush1.xpose.msra.mxu0 0.0
        %1436 = vmatprep.subr.mxu0 0.0
        %1437 = vmatpush1.xpose.msra.mxu0 0.0
        %1438 = vmatprep.subr.mxu0 0.0
        %1439 = vmatpush1.xpose.msra.mxu0 0.0
        %1440 = vmatprep.subr.mxu0 0.0
        %1441 = vmatpush1.xpose.msra.mxu0 0.0
        %1442 = vmatprep.subr.mxu0 0.0
        %1443 = vmatpush1.xpose.msra.mxu0 0.0
        %1444 = vmatprep.subr.mxu0 0.0
        %1445 = vmatpush1.xpose.msra.mxu0 0.0
        %1446 = vmatprep.subr.mxu0 0.0
        %1447 = vmatpush1.xpose.msra.mxu0 0.0
        %1448 = vmatprep.subr.mxu0 0.0
        %1449 = vmatpush1.xpose.msra.mxu0 0.0
        %1450 = vmatprep.mubr.f32.mxu0 0.0
        %1451 = vmatmul.mubr.f32.gmra.mrb[0].mxu0 %v1378
        %v1452 = vpop.f32.mrb[0].mxu0
        %v1453 = vadd.f32 0.0, %v1452
        %v1454 = vpop.f32.mrb[0].mxu0
        %1455 = vmatprep.mubr.f32.mxu0 0.0
        %1456 = vmatmul.mubr.f32.gmra.mrb[0].mxu0 %v1380
        %v1457 = vpop.f32.mrb[0].mxu0
        %v1458 = vadd.f32 0.0, %v1457
        %v1459 = vpop.f32.mrb[0].mxu0
        %1460 = vdwg.mxu0
        %v1461 = vmul.f32 %v1453, 0.03125
        %v1462 = vmul.f32 %v1458, 0.03125
        %v1463 = vtanh.pop %v1461
        %v1464 = vtanh.pop %v1462
        %s1465 = scalar_lea.vmem [#allocation8], 32
        %v1466 = vld [vmem:[%s1465] sm:$0xff]
        %v1467 = vld [vmem:[%s1465 + $0x8] sm:$0xff]
        %v1468 = vmul.f32 %v1102, %v1463
        %v1469 = vmul.f32 %v1102, %v1464
        %v1470 = vadd.f32 %v1466, %v1468
        %v1471 = vadd.f32 %v1467, %v1469
        %v1473 = vsel %vm1209, %v1470, 0
        %v1476 = vsel %vm1209, %v1471, 0
        %1478 = vmatprep.subr.mxu0 0.0
        %1479 = vmatpush1.msra.mxu0 %v922
        %1480 = vmatprep.subr.mxu0 0.0
        %1481 = vmatpush1.msra.mxu0 %v928
        %1482 = vmatprep.subr.mxu0 0.0
        %1483 = vmatpush1.msra.mxu0 0.0
        %1484 = vmatprep.subr.mxu0 0.0
        %1485 = vmatpush1.msra.mxu0 0.0
        %1486 = vmatprep.subr.mxu0 0.0
        %1487 = vmatpush1.msra.mxu0 0.0
        %1488 = vmatprep.subr.mxu0 0.0
        %1489 = vmatpush1.msra.mxu0 0.0
        %1490 = vmatprep.subr.mxu0 0.0
        %1491 = vmatpush1.msra.mxu0 0.0
        %1492 = vmatprep.subr.mxu0 0.0
        %1493 = vmatpush1.msra.mxu0 0.0
        %1494 = vmatprep.subr.mxu0 0.0
        %1495 = vmatpush1.msra.mxu0 0.0
        %1496 = vmatprep.subr.mxu0 0.0
        %1497 = vmatpush1.msra.mxu0 0.0
        %1498 = vmatprep.subr.mxu0 0.0
        %1499 = vmatpush1.msra.mxu0 0.0
        %1500 = vmatprep.subr.mxu0 0.0
        %1501 = vmatpush1.msra.mxu0 0.0
        %1502 = vmatprep.subr.mxu0 0.0
        %1503 = vmatpush1.msra.mxu0 0.0
        %1504 = vmatprep.subr.mxu0 0.0
        %1505 = vmatpush1.msra.mxu0 0.0
        %1506 = vmatprep.subr.mxu0 0.0
        %1507 = vmatpush1.msra.mxu0 0.0
        %1508 = vmatprep.subr.mxu0 0.0
        %1509 = vmatpush1.msra.mxu0 0.0
        %1510 = vmatprep.subr.mxu0 0.0
        %1511 = vmatpush1.msra.mxu0 0.0
        %1512 = vmatprep.subr.mxu0 0.0
        %1513 = vmatpush1.msra.mxu0 0.0
        %1514 = vmatprep.subr.mxu0 0.0
        %1515 = vmatpush1.msra.mxu0 0.0
        %1516 = vmatprep.subr.mxu0 0.0
        %1517 = vmatpush1.msra.mxu0 0.0
        %1518 = vmatprep.subr.mxu0 0.0
        %1519 = vmatpush1.msra.mxu0 0.0
        %1520 = vmatprep.subr.mxu0 0.0
        %1521 = vmatpush1.msra.mxu0 0.0
        %1522 = vmatprep.subr.mxu0 0.0
        %1523 = vmatpush1.msra.mxu0 0.0
        %1524 = vmatprep.subr.mxu0 0.0
        %1525 = vmatpush1.msra.mxu0 0.0
        %1526 = vmatprep.subr.mxu0 0.0
        %1527 = vmatpush1.msra.mxu0 0.0
        %1528 = vmatprep.subr.mxu0 0.0
        %1529 = vmatpush1.msra.mxu0 0.0
        %1530 = vmatprep.subr.mxu0 0.0
        %1531 = vmatpush1.msra.mxu0 0.0
        %1532 = vmatprep.subr.mxu0 0.0
        %1533 = vmatpush1.msra.mxu0 0.0
        %1534 = vmatprep.subr.mxu0 0.0
        %1535 = vmatpush1.msra.mxu0 0.0
        %1536 = vmatprep.subr.mxu0 0.0
        %1537 = vmatpush1.msra.mxu0 0.0
        %1538 = vmatprep.subr.mxu0 0.0
        %1539 = vmatpush1.msra.mxu0 0.0
        %1540 = vmatprep.subr.mxu0 0.0
        %1541 = vmatpush1.msra.mxu0 0.0
        %1542 = vmatprep.mubr.f32.mxu0 0.0
        %1543 = vmatmul.mubr.f32.gmra.mrb[0].mxu0 %v1473
        %v1544 = vpop.f32.mrb[0].mxu0
        %v1545 = vadd.f32 0.0, %v1544
        %v1546 = vpop.f32.mrb[0].mxu0
        %1547 = vmatprep.mubr.f32.mxu0 0.0
        %1548 = vmatmul.mubr.f32.gmra.mrb[0].mxu0 %v1476
        %v1549 = vpop.f32.mrb[0].mxu0
        %v1550 = vadd.f32 0.0, %v1549
        %v1551 = vpop.f32.mrb[0].mxu0
        %1552 = vdwg.mxu0
        %v1553 = vadd.f32 %v1364, %v1545
        %v1554 = vadd.f32 %v1369, %v1550
        %v1555 = vadd.f32 %v1553, %v768
        %v1556 = vadd.f32 %v1554, %v774
        %v1557 = vmax.f32 %v1555, 0.0
        %v1558 = vmax.f32 %v1556, 0.0
        %v1559 = vld [vmem:[#allocation9] sm:$0xff]
        %v1560 = vld [vmem:[#allocation9 + $0x8] sm:$0xff]
        %v1561 = vld [vmem:[#allocation9 + $0x10] sm:$0xff]
        %v1562 = vld [vmem:[#allocation9 + $0x18] sm:$0xff]
        %v1563 = vld [vmem:[#allocation9 + $0x20] sm:$0xff]
        %v1564 = vld [vmem:[#allocation9 + $0x28] sm:$0xff]
        %v1565 = vld [vmem:[#allocation9 + $0x30] sm:$0xff]
        %v1566 = vld [vmem:[#allocation9 + $0x38] sm:$0xff]
        %v1567 = vld [vmem:[#allocation9 + $0x40] sm:$0xff]
        %v1568 = vld [vmem:[#allocation9 + $0x48] sm:$0xff]
        %v1569 = vld [vmem:[#allocation9 + $0x50] sm:$0xff]
        %v1570 = vld [vmem:[#allocation9 + $0x58] sm:$0xff]
        %v1571 = vld [vmem:[#allocation9 + $0x60] sm:$0xff]
        %v1572 = vld [vmem:[#allocation9 + $0x68] sm:$0xff]
        %v1573 = vld [vmem:[#allocation9 + $0x70] sm:$0xff]
        %v1574 = vld [vmem:[#allocation9 + $0x78] sm:$0xff]
        %v1575 = vld [vmem:[#allocation9 + $0x80] sm:$0xff]
        %v1576 = vld [vmem:[#allocation9 + $0x88] sm:$0xff]
        %v1577 = vld [vmem:[#allocation9 + $0x90] sm:$0xff]
        %v1578 = vld [vmem:[#allocation9 + $0x98] sm:$0xff]
        %v1579 = vld [vmem:[#allocation9 + $0xa0] sm:$0xff]
        %v1580 = vld [vmem:[#allocation9 + $0xa8] sm:$0xff]
        %v1581 = vld [vmem:[#allocation9 + $0xb0] sm:$0xff]
        %v1582 = vld [vmem:[#allocation9 + $0xb8] sm:$0xff]
        %v1583 = vld [vmem:[#allocation9 + $0xc0] sm:$0xff]
        %v1584 = vld [vmem:[#allocation9 + $0xc8] sm:$0xff]
        %v1585 = vld [vmem:[#allocation9 + $0xd0] sm:$0xff]
        %v1586 = vld [vmem:[#allocation9 + $0xd8] sm:$0xff]
        %v1587 = vld [vmem:[#allocation9 + $0xe0] sm:$0xff]
        %v1588 = vld [vmem:[#allocation9 + $0xe8] sm:$0xff]
        %v1589 = vld [vmem:[#allocation9 + $0xf0] sm:$0xff]
        %v1590 = vld [vmem:[#allocation9 + $0xf8] sm:$0xff]
        %1591 = vmatprep.subr.mxu0 %v1560
        %1592 = vmatpush1.msra.mxu0 %v1559
        %1593 = vmatprep.subr.mxu0 %v1562
        %1594 = vmatpush1.msra.mxu0 %v1561
        %1595 = vmatprep.subr.mxu0 %v1564
        %1596 = vmatpush1.msra.mxu0 %v1563
        %1597 = vmatprep.subr.mxu0 %v1566
        %1598 = vmatpush1.msra.mxu0 %v1565
        %1599 = vmatprep.subr.mxu0 %v1568
        %1600 = vmatpush1.msra.mxu0 %v1567
        %1601 = vmatprep.subr.mxu0 %v1570
        %1602 = vmatpush1.msra.mxu0 %v1569
        %1603 = vmatprep.subr.mxu0 %v1572
        %1604 = vmatpush1.msra.mxu0 %v1571
        %1605 = vmatprep.subr.mxu0 %v1574
        %1606 = vmatpush1.msra.mxu0 %v1573
        %1607 = vmatprep.subr.mxu0 %v1576
        %1608 = vmatpush1.msra.mxu0 %v1575
        %1609 = vmatprep.subr.mxu0 %v1578
        %1610 = vmatpush1.msra.mxu0 %v1577
        %1611 = vmatprep.subr.mxu0 %v1580
        %1612 = vmatpush1.msra.mxu0 %v1579
        %1613 = vmatprep.subr.mxu0 %v1582
        %1614 = vmatpush1.msra.mxu0 %v1581
        %1615 = vmatprep.subr.mxu0 %v1584
        %1616 = vmatpush1.msra.mxu0 %v1583
        %1617 = vmatprep.subr.mxu0 %v1586
        %1618 = vmatpush1.msra.mxu0 %v1585
        %1619 = vmatprep.subr.mxu0 %v1588
        %1620 = vmatpush1.msra.mxu0 %v1587
        %1621 = vmatprep.subr.mxu0 %v1590
        %1622 = vmatpush1.msra.mxu0 %v1589
        %1623 = vmatprep.subr.mxu0 0.0
        %1624 = vmatpush1.msra.mxu0 0.0
        %1625 = vmatprep.subr.mxu0 0.0
        %1626 = vmatpush1.msra.mxu0 0.0
        %1627 = vmatprep.subr.mxu0 0.0
        %1628 = vmatpush1.msra.mxu0 0.0
        %1629 = vmatprep.subr.mxu0 0.0
        %1630 = vmatpush1.msra.mxu0 0.0
        %1631 = vmatprep.subr.mxu0 0.0
        %1632 = vmatpush1.msra.mxu0 0.0
        %1633 = vmatprep.subr.mxu0 0.0
        %1634 = vmatpush1.msra.mxu0 0.0
        %1635 = vmatprep.subr.mxu0 0.0
        %1636 = vmatpush1.msra.mxu0 0.0
        %1637 = vmatprep.subr.mxu0 0.0
        %1638 = vmatpush1.msra.mxu0 0.0
        %1639 = vmatprep.subr.mxu0 0.0
        %1640 = vmatpush1.msra.mxu0 0.0
        %1641 = vmatprep.subr.mxu0 0.0
        %1642 = vmatpush1.msra.mxu0 0.0
        %1643 = vmatprep.subr.mxu0 0.0
        %1644 = vmatpush1.msra.mxu0 0.0
        %1645 = vmatprep.subr.mxu0 0.0
        %1646 = vmatpush1.msra.mxu0 0.0
        %1647 = vmatprep.subr.mxu0 0.0
        %1648 = vmatpush1.msra.mxu0 0.0
        %1649 = vmatprep.subr.mxu0 0.0
        %1650 = vmatpush1.msra.mxu0 0.0
        %1651 = vmatprep.subr.mxu0 0.0
        %1652 = vmatpush1.msra.mxu0 0.0
        %1653 = vmatprep.subr.mxu0 0.0
        %1654 = vmatpush1.msra.mxu0 0.0
        %1655 = vmatprep.mubr.f32.mxu0 0.0
        %1656 = vmatmul.mubr.f32.gmra.mrb[0].mxu0 %v1557
        %v1657 = vpop.f32.mrb[0].mxu0
        %v1658 = vadd.f32 0.0, %v1657
        %v1659 = vpop.f32.mrb[0].mxu0
        %v1660 = vadd.f32 0.0, %v1659
        %1661 = vmatprep.mubr.f32.mxu0 0.0
        %1662 = vmatmul.mubr.f32.gmra.mrb[0].mxu0 %v1558
        %v1663 = vpop.f32.mrb[0].mxu0
        %v1664 = vadd.f32 0.0, %v1663
        %v1665 = vpop.f32.mrb[0].mxu0
        %v1666 = vadd.f32 0.0, %v1665
        %1667 = vdwg.mxu0
        %v1668 = vld [vmem:[#allocation11] sm:$0xff]
        %v1669 = vld [vmem:[#allocation11 + $0x8] sm:$0xff]
        %v1670 = vld [vmem:[#allocation11 + $0x10] sm:$0xff]
        %v1671 = vld [vmem:[#allocation11 + $0x18] sm:$0xff]
        %v1672 = vmul.f32 %v1658, %v1668
        %v1673 = vmul.f32 %v1660, %v1669
        %v1674 = vmul.f32 %v1664, %v1670
        %v1675 = vmul.f32 %v1666, %v1671
        %v1676 = vld [vmem:[#allocation12] sm:$0xff]
        %v1677 = vld [vmem:[#allocation12 + $0x8] sm:$0xff]
        %v1678 = vld [vmem:[#allocation12 + $0x10] sm:$0xff]
        %v1679 = vld [vmem:[#allocation12 + $0x18] sm:$0xff]
        %v1680 = vld [vmem:[#allocation12 + $0x20] sm:$0xff]
        %v1681 = vld [vmem:[#allocation12 + $0x28] sm:$0xff]
        %v1682 = vld [vmem:[#allocation12 + $0x30] sm:$0xff]
        %v1683 = vld [vmem:[#allocation12 + $0x38] sm:$0xff]
        %v1684 = vld [vmem:[#allocation12 + $0x40] sm:$0xff]
        %v1685 = vld [vmem:[#allocation12 + $0x48] sm:$0xff]
        %v1686 = vld [vmem:[#allocation12 + $0x50] sm:$0xff]
        %v1687 = vld [vmem:[#allocation12 + $0x58] sm:$0xff]
        %v1688 = vld [vmem:[#allocation12 + $0x60] sm:$0xff]
        %v1689 = vld [vmem:[#allocation12 + $0x68] sm:$0xff]
        %v1690 = vld [vmem:[#allocation12 + $0x70] sm:$0xff]
        %v1691 = vld [vmem:[#allocation12 + $0x78] sm:$0xff]
        %v1692 = vld [vmem:[#allocation12 + $0x80] sm:$0xff]
        %v1693 = vld [vmem:[#allocation12 + $0x88] sm:$0xff]
        %v1694 = vld [vmem:[#allocation12 + $0x90] sm:$0xff]
        %v1695 = vld [vmem:[#allocation12 + $0x98] sm:$0xff]
        %v1696 = vld [vmem:[#allocation12 + $0xa0] sm:$0xff]
        %v1697 = vld [vmem:[#allocation12 + $0xa8] sm:$0xff]
        %v1698 = vld [vmem:[#allocation12 + $0xb0] sm:$0xff]
        %v1699 = vld [vmem:[#allocation12 + $0xb8] sm:$0xff]
        %v1700 = vld [vmem:[#allocation12 + $0xc0] sm:$0xff]
        %v1701 = vld [vmem:[#allocation12 + $0xc8] sm:$0xff]
        %v1702 = vld [vmem:[#allocation12 + $0xd0] sm:$0xff]
        %v1703 = vld [vmem:[#allocation12 + $0xd8] sm:$0xff]
        %v1704 = vld [vmem:[#allocation12 + $0xe0] sm:$0xff]
        %v1705 = vld [vmem:[#allocation12 + $0xe8] sm:$0xff]
        %v1706 = vld [vmem:[#allocation12 + $0xf0] sm:$0xff]
        %v1707 = vld [vmem:[#allocation12 + $0xf8] sm:$0xff]
        %1708 = vmatprep.subr.mxu0 0.0
        %1709 = vmatpush1.msra.mxu0 %v1676
        %1710 = vmatprep.subr.mxu0 0.0
        %1711 = vmatpush1.msra.mxu0 %v1677
        %1712 = vmatprep.subr.mxu0 0.0
        %1713 = vmatpush1.msra.mxu0 %v1678
        %1714 = vmatprep.subr.mxu0 0.0
        %1715 = vmatpush1.msra.mxu0 %v1679
        %1716 = vmatprep.subr.mxu0 0.0
        %1717 = vmatpush1.msra.mxu0 %v1680
        %1718 = vmatprep.subr.mxu0 0.0
        %1719 = vmatpush1.msra.mxu0 %v1681
        %1720 = vmatprep.subr.mxu0 0.0
        %1721 = vmatpush1.msra.mxu0 %v1682
        %1722 = vmatprep.subr.mxu0 0.0
        %1723 = vmatpush1.msra.mxu0 %v1683
        %1724 = vmatprep.subr.mxu0 0.0
        %1725 = vmatpush1.msra.mxu0 %v1684
        %1726 = vmatprep.subr.mxu0 0.0
        %1727 = vmatpush1.msra.mxu0 %v1685
        %1728 = vmatprep.subr.mxu0 0.0
        %1729 = vmatpush1.msra.mxu0 %v1686
        %1730 = vmatprep.subr.mxu0 0.0
        %1731 = vmatpush1.msra.mxu0 %v1687
        %1732 = vmatprep.subr.mxu0 0.0
        %1733 = vmatpush1.msra.mxu0 %v1688
        %1734 = vmatprep.subr.mxu0 0.0
        %1735 = vmatpush1.msra.mxu0 %v1689
        %1736 = vmatprep.subr.mxu0 0.0
        %1737 = vmatpush1.msra.mxu0 %v1690
        %1738 = vmatprep.subr.mxu0 0.0
        %1739 = vmatpush1.msra.mxu0 %v1691
        %1740 = vmatprep.subr.mxu0 0.0
        %1741 = vmatpush1.msra.mxu0 %v1692
        %1742 = vmatprep.subr.mxu0 0.0
        %1743 = vmatpush1.msra.mxu0 %v1693
        %1744 = vmatprep.subr.mxu0 0.0
        %1745 = vmatpush1.msra.mxu0 %v1694
        %1746 = vmatprep.subr.mxu0 0.0
        %1747 = vmatpush1.msra.mxu0 %v1695
        %1748 = vmatprep.subr.mxu0 0.0
        %1749 = vmatpush1.msra.mxu0 %v1696
        %1750 = vmatprep.subr.mxu0 0.0
        %1751 = vmatpush1.msra.mxu0 %v1697
        %1752 = vmatprep.subr.mxu0 0.0
        %1753 = vmatpush1.msra.mxu0 %v1698
        %1754 = vmatprep.subr.mxu0 0.0
        %1755 = vmatpush1.msra.mxu0 %v1699
        %1756 = vmatprep.subr.mxu0 0.0
        %1757 = vmatpush1.msra.mxu0 %v1700
        %1758 = vmatprep.subr.mxu0 0.0
        %1759 = vmatpush1.msra.mxu0 %v1701
        %1760 = vmatprep.subr.mxu0 0.0
        %1761 = vmatpush1.msra.mxu0 %v1702
        %1762 = vmatprep.subr.mxu0 0.0
        %1763 = vmatpush1.msra.mxu0 %v1703
        %1764 = vmatprep.subr.mxu0 0.0
        %1765 = vmatpush1.msra.mxu0 %v1704
        %1766 = vmatprep.subr.mxu0 0.0
        %1767 = vmatpush1.msra.mxu0 %v1705
        %1768 = vmatprep.subr.mxu0 0.0
        %1769 = vmatpush1.msra.mxu0 %v1706
        %1770 = vmatprep.subr.mxu0 0.0
        %1771 = vmatpush1.msra.mxu0 %v1707
        %1772 = vmatprep.mubr.f32.mxu0 %v1673
        %1773 = vmatmul.mubr.f32.gmra.mrb[0].mxu0 %v1672
        %v1774 = vpop.f32.mrb[0].mxu0
        %v1775 = vadd.f32 0.0, %v1774
        %v1776 = vpop.f32.mrb[0].mxu0
        %1777 = vmatprep.mubr.f32.mxu0 %v1675
        %1778 = vmatmul.mubr.f32.gmra.mrb[0].mxu0 %v1674
        %v1779 = vpop.f32.mrb[0].mxu0
        %v1780 = vadd.f32 0.0, %v1779
        %v1781 = vpop.f32.mrb[0].mxu0
        %1782 = vdwg.mxu0
        %v1783 = vsel %vm1209, %v1775, 0.0
        %v1784 = vsel %vm1209, %v1780, 0.0
        %v1785 = vadd.f32 %v1783, %v1784
        %v1786 = vrot.slane %v1785, 4
        %v1787 = vadd.f32 %v1785, %v1786
        %v1788 = vrot.slane %v1787, 2
        %v1789 = vadd.f32 %v1787, %v1788
        %v1790 = vrot.slane %v1789, 1
        %v1791 = vadd.f32 %v1789, %v1790
        %v1792 = vstv %s627
        %v1793 = vadd.f32 %v1791, %v1792
        %v1794 = vxor.u32 %v1793, 2147483648
        %v1795 = vmul.f32 %v1794, 1.442695
        %v1796 = vpow.pop %v1795
        %v1797 = vadd.f32 %v1796, 1.0
        %v1798 = vrcp.pop %v1797
        %v1799 = vmul.f32 1.0, %v1798
        %v1800 = vadd.f32 %v1799, 1.0
        %v1801 = vld [vmem:[%s8] sm:$0xff]
        %v1802 = vld [vmem:[%s8 + $0x8] sm:$0xff]
        %v1803 = vmul.f32 %v1800, %v1801
        %v1804 = vmul.f32 %v1800, %v1802
        %v1806 = vsel %vm1209, %v1803, 0
        %v1809 = vsel %vm1209, %v1804, 0
        %1811 = vmatprep.subr.mxu0 0.0
        %1812 = vmatpush1.msra.mxu0 %v1557
        %1813 = vmatprep.subr.mxu0 0.0
        %1814 = vmatpush1.msra.mxu0 %v1558
        %1815 = vmatprep.subr.mxu0 0.0
        %1816 = vmatpush1.msra.mxu0 0.0
        %1817 = vmatprep.subr.mxu0 0.0
        %1818 = vmatpush1.msra.mxu0 0.0
        %1819 = vmatprep.subr.mxu0 0.0
        %1820 = vmatpush1.msra.mxu0 0.0
        %1821 = vmatprep.subr.mxu0 0.0
        %1822 = vmatpush1.msra.mxu0 0.0
        %1823 = vmatprep.subr.mxu0 0.0
        %1824 = vmatpush1.msra.mxu0 0.0
        %1825 = vmatprep.subr.mxu0 0.0
        %1826 = vmatpush1.msra.mxu0 0.0
        %1827 = vmatprep.subr.mxu0 0.0
        %1828 = vmatpush1.msra.mxu0 0.0
        %1829 = vmatprep.subr.mxu0 0.0
        %1830 = vmatpush1.msra.mxu0 0.0
        %1831 = vmatprep.subr.mxu0 0.0
        %1832 = vmatpush1.msra.mxu0 0.0
        %1833 = vmatprep.subr.mxu0 0.0
        %1834 = vmatpush1.msra.mxu0 0.0
        %1835 = vmatprep.subr.mxu0 0.0
        %1836 = vmatpush1.msra.mxu0 0.0
        %1837 = vmatprep.subr.mxu0 0.0
        %1838 = vmatpush1.msra.mxu0 0.0
        %1839 = vmatprep.subr.mxu0 0.0
        %1840 = vmatpush1.msra.mxu0 0.0
        %1841 = vmatprep.subr.mxu0 0.0
        %1842 = vmatpush1.msra.mxu0 0.0
        %1843 = vmatprep.subr.mxu0 0.0
        %1844 = vmatpush1.msra.mxu0 0.0
        %1845 = vmatprep.subr.mxu0 0.0
        %1846 = vmatpush1.msra.mxu0 0.0
        %1847 = vmatprep.subr.mxu0 0.0
        %1848 = vmatpush1.msra.mxu0 0.0
        %1849 = vmatprep.subr.mxu0 0.0
        %1850 = vmatpush1.msra.mxu0 0.0
        %1851 = vmatprep.subr.mxu0 0.0
        %1852 = vmatpush1.msra.mxu0 0.0
        %1853 = vmatprep.subr.mxu0 0.0
        %1854 = vmatpush1.msra.mxu0 0.0
        %1855 = vmatprep.subr.mxu0 0.0
        %1856 = vmatpush1.msra.mxu0 0.0
        %1857 = vmatprep.subr.mxu0 0.0
        %1858 = vmatpush1.msra.mxu0 0.0
        %1859 = vmatprep.subr.mxu0 0.0
        %1860 = vmatpush1.msra.mxu0 0.0
        %1861 = vmatprep.subr.mxu0 0.0
        %1862 = vmatpush1.msra.mxu0 0.0
        %1863 = vmatprep.subr.mxu0 0.0
        %1864 = vmatpush1.msra.mxu0 0.0
        %1865 = vmatprep.subr.mxu0 0.0
        %1866 = vmatpush1.msra.mxu0 0.0
        %1867 = vmatprep.subr.mxu0 0.0
        %1868 = vmatpush1.msra.mxu0 0.0
        %1869 = vmatprep.subr.mxu0 0.0
        %1870 = vmatpush1.msra.mxu0 0.0
        %1871 = vmatprep.subr.mxu0 0.0
        %1872 = vmatpush1.msra.mxu0 0.0
        %1873 = vmatprep.subr.mxu0 0.0
        %1874 = vmatpush1.msra.mxu0 0.0
        %1875 = vmatprep.mubr.f32.mxu0 0.0
        %1876 = vmatmul.mubr.f32.gmra.mrb[0].mxu0 %v1806
        %v1877 = vpop.f32.mrb[0].mxu0
        %v1878 = vadd.f32 0.0, %v1877
        %v1879 = vpop.f32.mrb[0].mxu0
        %1880 = vmatprep.mubr.f32.mxu0 0.0
        %1881 = vmatmul.mubr.f32.gmra.mrb[0].mxu0 %v1809
        %v1882 = vpop.f32.mrb[0].mxu0
        %v1883 = vadd.f32 0.0, %v1882
        %v1884 = vpop.f32.mrb[0].mxu0
        %1885 = vdwg.mxu0
        %v1886 = vadd.f32 %v1878, %v1883
        %v1887 = vrot.slane %v1886, 4
        %v1888 = vadd.f32 %v1886, %v1887
        %v1889 = vrot.slane %v1888, 2
        %v1890 = vadd.f32 %v1888, %v1889
        %v1891 = vrot.slane %v1890, 1
        %v1892 = vadd.f32 %v1890, %v1891
        %v1893 = vmul.f32 %v1892, 0.0625
        %v1894 = vld [vmem:[#allocation14] sm:$0xff]
        %v1895 = vld [vmem:[#allocation14 + $0x8] sm:$0xff]
        %v1896 = vld [vmem:[#allocation14 + $0x10] sm:$0xff]
        %v1897 = vld [vmem:[#allocation14 + $0x18] sm:$0xff]
        %v1898 = vld [vmem:[#allocation14 + $0x20] sm:$0xff]
        %v1899 = vld [vmem:[#allocation14 + $0x28] sm:$0xff]
        %v1900 = vld [vmem:[#allocation14 + $0x30] sm:$0xff]
        %v1901 = vld [vmem:[#allocation14 + $0x38] sm:$0xff]
        %v1902 = vld [vmem:[#allocation14 + $0x40] sm:$0xff]
        %v1903 = vld [vmem:[#allocation14 + $0x48] sm:$0xff]
        %v1904 = vld [vmem:[#allocation14 + $0x50] sm:$0xff]
        %v1905 = vld [vmem:[#allocation14 + $0x58] sm:$0xff]
        %v1906 = vld [vmem:[#allocation14 + $0x60] sm:$0xff]
        %v1907 = vld [vmem:[#allocation14 + $0x68] sm:$0xff]
        %v1908 = vld [vmem:[#allocation14 + $0x70] sm:$0xff]
        %v1909 = vld [vmem:[#allocation14 + $0x78] sm:$0xff]
        %v1910 = vstv %s628
        %1911 = vmatprep.subr.mxu0 0.0
        %1912 = vmatpush1.msra.mxu0 %v1894
        %1913 = vmatprep.subr.mxu0 0.0
        %1914 = vmatpush1.msra.mxu0 %v1895
        %1915 = vmatprep.subr.mxu0 0.0
        %1916 = vmatpush1.msra.mxu0 %v1896
        %1917 = vmatprep.subr.mxu0 0.0
        %1918 = vmatpush1.msra.mxu0 %v1897
        %1919 = vmatprep.subr.mxu0 0.0
        %1920 = vmatpush1.msra.mxu0 %v1898
        %1921 = vmatprep.subr.mxu0 0.0
        %1922 = vmatpush1.msra.mxu0 %v1899
        %1923 = vmatprep.subr.mxu0 0.0
        %1924 = vmatpush1.msra.mxu0 %v1900
        %1925 = vmatprep.subr.mxu0 0.0
        %1926 = vmatpush1.msra.mxu0 %v1901
        %1927 = vmatprep.subr.mxu0 0.0
        %1928 = vmatpush1.msra.mxu0 %v1902
        %1929 = vmatprep.subr.mxu0 0.0
        %1930 = vmatpush1.msra.mxu0 %v1903
        %1931 = vmatprep.subr.mxu0 0.0
        %1932 = vmatpush1.msra.mxu0 %v1904
        %1933 = vmatprep.subr.mxu0 0.0
        %1934 = vmatpush1.msra.mxu0 %v1905
        %1935 = vmatprep.subr.mxu0 0.0
        %1936 = vmatpush1.msra.mxu0 %v1906
        %1937 = vmatprep.subr.mxu0 0.0
        %1938 = vmatpush1.msra.mxu0 %v1907
        %1939 = vmatprep.subr.mxu0 0.0
        %1940 = vmatpush1.msra.mxu0 %v1908
        %1941 = vmatprep.subr.mxu0 0.0
        %1942 = vmatpush1.msra.mxu0 %v1909
        %1943 = vmatprep.subr.mxu0 0.0
        %1944 = vmatpush1.msra.mxu0 0.0
        %1945 = vmatprep.subr.mxu0 0.0
        %1946 = vmatpush1.msra.mxu0 0.0
        %1947 = vmatprep.subr.mxu0 0.0
        %1948 = vmatpush1.msra.mxu0 0.0
        %1949 = vmatprep.subr.mxu0 0.0
        %1950 = vmatpush1.msra.mxu0 0.0
        %1951 = vmatprep.subr.mxu0 0.0
        %1952 = vmatpush1.msra.mxu0 0.0
        %1953 = vmatprep.subr.mxu0 0.0
        %1954 = vmatpush1.msra.mxu0 0.0
        %1955 = vmatprep.subr.mxu0 0.0
        %1956 = vmatpush1.msra.mxu0 0.0
        %1957 = vmatprep.subr.mxu0 0.0
        %1958 = vmatpush1.msra.mxu0 0.0
        %1959 = vmatprep.subr.mxu0 0.0
        %1960 = vmatpush1.msra.mxu0 0.0
        %1961 = vmatprep.subr.mxu0 0.0
        %1962 = vmatpush1.msra.mxu0 0.0
        %1963 = vmatprep.subr.mxu0 0.0
        %1964 = vmatpush1.msra.mxu0 0.0
        %1965 = vmatprep.subr.mxu0 0.0
        %1966 = vmatpush1.msra.mxu0 0.0
        %1967 = vmatprep.subr.mxu0 0.0
        %1968 = vmatpush1.msra.mxu0 0.0
        %1969 = vmatprep.subr.mxu0 0.0
        %1970 = vmatpush1.msra.mxu0 0.0
        %1971 = vmatprep.subr.mxu0 0.0
        %1972 = vmatpush1.msra.mxu0 0.0
        %1973 = vmatprep.subr.mxu0 0.0
        %1974 = vmatpush1.msra.mxu0 0.0
        %1975 = vmatprep.mubr.f32.mxu0 0.0
        %1976 = vmatmul.mubr.f32.gmra.mrb[0].mxu0 %v1893
        %v1977 = vpop.f32.mrb[0].mxu0
        %v1978 = vadd.f32 %v1910, %v1977
        %v1979 = vpop.f32.mrb[0].mxu0
        %1980 = vdwg.mxu0
        %v1981 = vxor.u32 %v1978, 2147483648
        %v1982 = vmul.f32 %v1981, 1.442695
        %v1983 = vpow.pop %v1982
        %v1984 = vadd.f32 %v1983, 1.0
        %v1985 = vrcp.pop %v1984
        %v1986 = vmul.f32 1.0, %v1985
        %v1987 = vadd.f32 %v1986, 1.0
        %v1988 = vlaneseq
        %v1989 = vshrl.u32 %v1988, 7
        %v1990 = vsub.s32 0, %v1989
        %v1991 = vrot.slane %v1987, %v1990
        %v1992 = vmul.f32 %v1878, %v1991
        %v1993 = vmul.f32 %v1883, %v1991
        %v1994 = vadd.f32 %v1992, %v1993
        %v1995 = vrot.slane %v1994, 4
        %v1996 = vadd.f32 %v1994, %v1995
        %v1997 = vrot.slane %v1996, 2
        %v1998 = vadd.f32 %v1996, %v1997
        %v1999 = vrot.slane %v1998, 1
        %v2000 = vadd.f32 %v1998, %v1999
        %v2001 = vmul.f32 %v2000, 0.0625
        %v2002 = vld [vmem:[#allocation15] sm:$0xff]
        %v2003 = vld [vmem:[#allocation15 + $0x8] sm:$0xff]
        %v2004 = vld [vmem:[#allocation15 + $0x10] sm:$0xff]
        %v2005 = vld [vmem:[#allocation15 + $0x18] sm:$0xff]
        %v2006 = vld [vmem:[#allocation15 + $0x20] sm:$0xff]
        %v2007 = vld [vmem:[#allocation15 + $0x28] sm:$0xff]
        %v2008 = vld [vmem:[#allocation15 + $0x30] sm:$0xff]
        %v2009 = vld [vmem:[#allocation15 + $0x38] sm:$0xff]
        %v2010 = vld [vmem:[#allocation15 + $0x40] sm:$0xff]
        %v2011 = vld [vmem:[#allocation15 + $0x48] sm:$0xff]
        %v2012 = vld [vmem:[#allocation15 + $0x50] sm:$0xff]
        %v2013 = vld [vmem:[#allocation15 + $0x58] sm:$0xff]
        %v2014 = vld [vmem:[#allocation15 + $0x60] sm:$0xff]
        %v2015 = vld [vmem:[#allocation15 + $0x68] sm:$0xff]
        %v2016 = vld [vmem:[#allocation15 + $0x70] sm:$0xff]
        %v2017 = vld [vmem:[#allocation15 + $0x78] sm:$0xff]
        %v2018 = vld [vmem:[%s11] sm:$0x1]
        %2019 = vmatprep.subr.mxu0 0.0
        %2020 = vmatpush1.msra.mxu0 %v2002
        %2021 = vmatprep.subr.mxu0 0.0
        %2022 = vmatpush1.msra.mxu0 %v2003
        %2023 = vmatprep.subr.mxu0 0.0
        %2024 = vmatpush1.msra.mxu0 %v2004
        %2025 = vmatprep.subr.mxu0 0.0
        %2026 = vmatpush1.msra.mxu0 %v2005
        %2027 = vmatprep.subr.mxu0 0.0
        %2028 = vmatpush1.msra.mxu0 %v2006
        %2029 = vmatprep.subr.mxu0 0.0
        %2030 = vmatpush1.msra.mxu0 %v2007
        %2031 = vmatprep.subr.mxu0 0.0
        %2032 = vmatpush1.msra.mxu0 %v2008
        %2033 = vmatprep.subr.mxu0 0.0
        %2034 = vmatpush1.msra.mxu0 %v2009
        %2035 = vmatprep.subr.mxu0 0.0
        %2036 = vmatpush1.msra.mxu0 %v2010
        %2037 = vmatprep.subr.mxu0 0.0
        %2038 = vmatpush1.msra.mxu0 %v2011
        %2039 = vmatprep.subr.mxu0 0.0
        %2040 = vmatpush1.msra.mxu0 %v2012
        %2041 = vmatprep.subr.mxu0 0.0
        %2042 = vmatpush1.msra.mxu0 %v2013
        %2043 = vmatprep.subr.mxu0 0.0
        %2044 = vmatpush1.msra.mxu0 %v2014
        %2045 = vmatprep.subr.mxu0 0.0
        %2046 = vmatpush1.msra.mxu0 %v2015
        %2047 = vmatprep.subr.mxu0 0.0
        %2048 = vmatpush1.msra.mxu0 %v2016
        %2049 = vmatprep.subr.mxu0 0.0
        %2050 = vmatpush1.msra.mxu0 %v2017
        %2051 = vmatprep.subr.mxu0 0.0
        %2052 = vmatpush1.msra.mxu0 0.0
        %2053 = vmatprep.subr.mxu0 0.0
        %2054 = vmatpush1.msra.mxu0 0.0
        %2055 = vmatprep.subr.mxu0 0.0
        %2056 = vmatpush1.msra.mxu0 0.0
        %2057 = vmatprep.subr.mxu0 0.0
        %2058 = vmatpush1.msra.mxu0 0.0
        %2059 = vmatprep.subr.mxu0 0.0
        %2060 = vmatpush1.msra.mxu0 0.0
        %2061 = vmatprep.subr.mxu0 0.0
        %2062 = vmatpush1.msra.mxu0 0.0
        %2063 = vmatprep.subr.mxu0 0.0
        %2064 = vmatpush1.msra.mxu0 0.0
        %2065 = vmatprep.subr.mxu0 0.0
        %2066 = vmatpush1.msra.mxu0 0.0
        %2067 = vmatprep.subr.mxu0 0.0
        %2068 = vmatpush1.msra.mxu0 0.0
        %2069 = vmatprep.subr.mxu0 0.0
        %2070 = vmatpush1.msra.mxu0 0.0
        %2071 = vmatprep.subr.mxu0 0.0
        %2072 = vmatpush1.msra.mxu0 0.0
        %2073 = vmatprep.subr.mxu0 0.0
        %2074 = vmatpush1.msra.mxu0 0.0
        %2075 = vmatprep.subr.mxu0 0.0
        %2076 = vmatpush1.msra.mxu0 0.0
        %2077 = vmatprep.subr.mxu0 0.0
        %2078 = vmatpush1.msra.mxu0 0.0
        %2079 = vmatprep.subr.mxu0 0.0
        %2080 = vmatpush1.msra.mxu0 0.0
        %2081 = vmatprep.subr.mxu0 0.0
        %2082 = vmatpush1.msra.mxu0 0.0
        %2083 = vmatprep.mubr.f32.mxu0 0.0
        %2084 = vmatmul.mubr.f32.gmra.mrb[0].mxu0 %v2001
        %v2085 = vpop.f32.mrb[0].mxu0
        %v2086 = vadd.f32 %v2018, %v2085
        %v2087 = vpop.f32.mrb[0].mxu0
        %2088 = vdwg.mxu0
        %v2089 = vmax.f32 %v2086, 0.0
        %v2090 = vld [vmem:[%s12] sm:$0xff]
        %v2091 = vld [vmem:[%s13] sm:$0x1]
        %vm2092 = vcmask 64512
        %v2094 = vsel %vm2092, %v2089, 0
        %2096 = vmatprep.subr.mxu0 0.0
        %2097 = vmatpush1.msra.mxu0 %v2090
        %2098 = vmatprep.subr.mxu0 0.0
        %2099 = vmatpush1.msra.mxu0 0.0
        %2100 = vmatprep.subr.mxu0 0.0
        %2101 = vmatpush1.msra.mxu0 0.0
        %2102 = vmatprep.subr.mxu0 0.0
        %2103 = vmatpush1.msra.mxu0 0.0
        %2104 = vmatprep.subr.mxu0 0.0
        %2105 = vmatpush1.msra.mxu0 0.0
        %2106 = vmatprep.subr.mxu0 0.0
        %2107 = vmatpush1.msra.mxu0 0.0
        %2108 = vmatprep.subr.mxu0 0.0
        %2109 = vmatpush1.msra.mxu0 0.0
        %2110 = vmatprep.subr.mxu0 0.0
        %2111 = vmatpush1.msra.mxu0 0.0
        %2112 = vmatprep.subr.mxu0 0.0
        %2113 = vmatpush1.msra.mxu0 0.0
        %2114 = vmatprep.subr.mxu0 0.0
        %2115 = vmatpush1.msra.mxu0 0.0
        %2116 = vmatprep.subr.mxu0 0.0
        %2117 = vmatpush1.msra.mxu0 0.0
        %2118 = vmatprep.subr.mxu0 0.0
        %2119 = vmatpush1.msra.mxu0 0.0
        %2120 = vmatprep.subr.mxu0 0.0
        %2121 = vmatpush1.msra.mxu0 0.0
        %2122 = vmatprep.subr.mxu0 0.0
        %2123 = vmatpush1.msra.mxu0 0.0
        %2124 = vmatprep.subr.mxu0 0.0
        %2125 = vmatpush1.msra.mxu0 0.0
        %2126 = vmatprep.subr.mxu0 0.0
        %2127 = vmatpush1.msra.mxu0 0.0
        %2128 = vmatprep.subr.mxu0 0.0
        %2129 = vmatpush1.msra.mxu0 0.0
        %2130 = vmatprep.subr.mxu0 0.0
        %2131 = vmatpush1.msra.mxu0 0.0
        %2132 = vmatprep.subr.mxu0 0.0
        %2133 = vmatpush1.msra.mxu0 0.0
        %2134 = vmatprep.subr.mxu0 0.0
        %2135 = vmatpush1.msra.mxu0 0.0
        %2136 = vmatprep.subr.mxu0 0.0
        %2137 = vmatpush1.msra.mxu0 0.0
        %2138 = vmatprep.subr.mxu0 0.0
        %2139 = vmatpush1.msra.mxu0 0.0
        %2140 = vmatprep.subr.mxu0 0.0
        %2141 = vmatpush1.msra.mxu0 0.0
        %2142 = vmatprep.subr.mxu0 0.0
        %2143 = vmatpush1.msra.mxu0 0.0
        %2144 = vmatprep.subr.mxu0 0.0
        %2145 = vmatpush1.msra.mxu0 0.0
        %2146 = vmatprep.subr.mxu0 0.0
        %2147 = vmatpush1.msra.mxu0 0.0
        %2148 = vmatprep.subr.mxu0 0.0
        %2149 = vmatpush1.msra.mxu0 0.0
        %2150 = vmatprep.subr.mxu0 0.0
        %2151 = vmatpush1.msra.mxu0 0.0
        %2152 = vmatprep.subr.mxu0 0.0
        %2153 = vmatpush1.msra.mxu0 0.0
        %2154 = vmatprep.subr.mxu0 0.0
        %2155 = vmatpush1.msra.mxu0 0.0
        %2156 = vmatprep.subr.mxu0 0.0
        %2157 = vmatpush1.msra.mxu0 0.0
        %2158 = vmatprep.subr.mxu0 0.0
        %2159 = vmatpush1.msra.mxu0 0.0
        %2160 = vmatprep.mubr.f32.mxu0 0.0
        %2161 = vmatmul.mubr.f32.gmra.mrb[0].mxu0 %v2094
        %v2162 = vpop.f32.mrb[0].mxu0
        %v2163 = vadd.f32 %v2091, %v2162
        %v2164 = vpop.f32.mrb[0].mxu0
        %2165 = vdwg.mxu0
        %v2166 = vxor.u32 %v2163, 2147483648
        %v2167 = vmul.f32 %v2166, 1.442695
        %v2168 = vpow.pop %v2167
        %v2169 = vadd.f32 %v2168, 1.0
        %v2170 = vrcp.pop %v2169
        %v2171 = vmul.f32 1.0, %v2170
        %v2172 = vadd.f32 %v2171, 1.0
        %v2173 = vlaneseq
        %v2174 = vshrl.u32 %v2173, 7
        %v2175 = vsub.s32 0, %v2174
        %v2176 = vrot.slane %v2172, %v2175
        %v2177 = vmul.f32 %v1992, %v2176
        %v2178 = vmul.f32 %v1993, %v2176
        %v2179 = vld [vmem:[%s14] sm:$0xff]
        %v2180 = vld [vmem:[%s14 + $0x8] sm:$0xff]
        %v2181 = vld [vmem:[%s14 + $0x10] sm:$0xff]
        %v2182 = vld [vmem:[%s14 + $0x18] sm:$0xff]
        %v2183 = vld [vmem:[%s14 + $0x20] sm:$0xff]
        %v2184 = vld [vmem:[%s14 + $0x28] sm:$0xff]
        %v2185 = vld [vmem:[%s14 + $0x30] sm:$0xff]
        %v2186 = vld [vmem:[%s14 + $0x38] sm:$0xff]
        %v2187 = vld [vmem:[%s14 + $0x40] sm:$0xff]
        %v2188 = vld [vmem:[%s14 + $0x48] sm:$0xff]
        %v2189 = vld [vmem:[%s14 + $0x50] sm:$0xff]
        %v2190 = vld [vmem:[%s14 + $0x58] sm:$0xff]
        %v2191 = vld [vmem:[%s14 + $0x60] sm:$0xff]
        %v2192 = vld [vmem:[%s14 + $0x68] sm:$0xff]
        %v2193 = vld [vmem:[%s14 + $0x70] sm:$0xff]
        %v2194 = vld [vmem:[%s14 + $0x78] sm:$0xff]
        %2195 = vmatprep.subr.mxu0 0.0
        %2196 = vmatpush1.msra.mxu0 %v2179
        %2197 = vmatprep.subr.mxu0 0.0
        %2198 = vmatpush1.msra.mxu0 %v2180
        %2199 = vmatprep.subr.mxu0 0.0
        %2200 = vmatpush1.msra.mxu0 %v2181
        %2201 = vmatprep.subr.mxu0 0.0
        %2202 = vmatpush1.msra.mxu0 %v2182
        %2203 = vmatprep.subr.mxu0 0.0
        %2204 = vmatpush1.msra.mxu0 %v2183
        %2205 = vmatprep.subr.mxu0 0.0
        %2206 = vmatpush1.msra.mxu0 %v2184
        %2207 = vmatprep.subr.mxu0 0.0
        %2208 = vmatpush1.msra.mxu0 %v2185
        %2209 = vmatprep.subr.mxu0 0.0
        %2210 = vmatpush1.msra.mxu0 %v2186
        %2211 = vmatprep.subr.mxu0 0.0
        %2212 = vmatpush1.msra.mxu0 %v2187
        %2213 = vmatprep.subr.mxu0 0.0
        %2214 = vmatpush1.msra.mxu0 %v2188
        %2215 = vmatprep.subr.mxu0 0.0
        %2216 = vmatpush1.msra.mxu0 %v2189
        %2217 = vmatprep.subr.mxu0 0.0
        %2218 = vmatpush1.msra.mxu0 %v2190
        %2219 = vmatprep.subr.mxu0 0.0
        %2220 = vmatpush1.msra.mxu0 %v2191
        %2221 = vmatprep.subr.mxu0 0.0
        %2222 = vmatpush1.msra.mxu0 %v2192
        %2223 = vmatprep.subr.mxu0 0.0
        %2224 = vmatpush1.msra.mxu0 %v2193
        %2225 = vmatprep.subr.mxu0 0.0
        %2226 = vmatpush1.msra.mxu0 %v2194
        %2227 = vmatprep.subr.mxu0 0.0
        %2228 = vmatpush1.msra.mxu0 0.0
        %2229 = vmatprep.subr.mxu0 0.0
        %2230 = vmatpush1.msra.mxu0 0.0
        %2231 = vmatprep.subr.mxu0 0.0
        %2232 = vmatpush1.msra.mxu0 0.0
        %2233 = vmatprep.subr.mxu0 0.0
        %2234 = vmatpush1.msra.mxu0 0.0
        %2235 = vmatprep.subr.mxu0 0.0
        %2236 = vmatpush1.msra.mxu0 0.0
        %2237 = vmatprep.subr.mxu0 0.0
        %2238 = vmatpush1.msra.mxu0 0.0
        %2239 = vmatprep.subr.mxu0 0.0
        %2240 = vmatpush1.msra.mxu0 0.0
        %2241 = vmatprep.subr.mxu0 0.0
        %2242 = vmatpush1.msra.mxu0 0.0
        %2243 = vmatprep.subr.mxu0 0.0
        %2244 = vmatpush1.msra.mxu0 0.0
        %2245 = vmatprep.subr.mxu0 0.0
        %2246 = vmatpush1.msra.mxu0 0.0
        %2247 = vmatprep.subr.mxu0 0.0
        %2248 = vmatpush1.msra.mxu0 0.0
        %2249 = vmatprep.subr.mxu0 0.0
        %2250 = vmatpush1.msra.mxu0 0.0
        %2251 = vmatprep.subr.mxu0 0.0
        %2252 = vmatpush1.msra.mxu0 0.0
        %2253 = vmatprep.subr.mxu0 0.0
        %2254 = vmatpush1.msra.mxu0 0.0
        %2255 = vmatprep.subr.mxu0 0.0
        %2256 = vmatpush1.msra.mxu0 0.0
        %2257 = vmatprep.subr.mxu0 0.0
        %2258 = vmatpush1.msra.mxu0 0.0
        %2259 = vmatprep.mubr.f32.mxu0 0.0
        %2260 = vmatmul.mubr.f32.gmra.mrb[0].mxu0 %v2177
        %v2261 = vpop.f32.mrb[0].mxu0
        %v2262 = vadd.f32 %v770, %v2261
        %v2263 = vpop.f32.mrb[0].mxu0
        %2264 = vmatprep.mubr.f32.mxu0 0.0
        %2265 = vmatmul.mubr.f32.gmra.mrb[0].mxu0 %v2178
        %v2266 = vpop.f32.mrb[0].mxu0
        %v2267 = vadd.f32 %v776, %v2266
        %v2268 = vpop.f32.mrb[0].mxu0
        %2269 = vdwg.mxu0
        %v2270 = vmax.f32 %v2262, 0.0
        %v2271 = vmax.f32 %v2267, 0.0
        %2272 = vst [vmem:[%s623] sm:$0xff] %v2270
        %2273 = vst [vmem:[%s623 + $0x8] sm:$0xff] %v2271
        %p2274 = scmp.lt.s32.totalorder %s32, 1
        %s2275 = scalar_select %p2274, %s32, 1
        %s2276 = smul.addr %s2275, 2
        %s2277 = smul.addr %s2276, 8
        %s2278 = scalar_lea.vmem %s15, %s2277
        // Predicated region
        $region117: #{_lambda_.1} parent=79 // pred_check
          %p2279 = pneg %p370
        $region118: #{_lambda_.1} parent=79 // pred_check_branch
          %2281 = sbr.rel (%p2279) target = $region120
        $region119: #{_lambda_.1} parent=79 // pred_region
          _
        $region120: #{_lambda_.1} parent=79 // pred_fallthru
          _
      $region80: #{_lambda_.1} parent=5 // pred_fallthru
        _
      %p2282 = scmp.le.s32.totalorder 2, %s27
      // Predicated region
      $region121: #{_lambda_.1} parent=5 // pred_check
        %p2283 = pneg %p2282
      $region122: #{_lambda_.1} parent=5 // pred_check_branch
        %2285 = sbr.rel (%p2283) target = $region124
      $region123: #{_lambda_.1} parent=5 // pred_region
        %s2286 = ssub.s32 %s27, 2
        // Predicated region
        $region125: #{_lambda_.1} parent=123 // pred_check
          %p2287 = pneg %p376
        $region126: #{_lambda_.1} parent=123 // pred_check_branch
          %2289 = sbr.rel (%p2287) target = $region128
        $region127: #{_lambda_.1} parent=123 // pred_region
          %p2290 = scmp.lt.s32.totalorder %s33, 1
          %s2291 = scalar_select %p2290, %s33, 1
          %s2292 = smul.addr %s2291, 2
          %s2293 = smul.addr %s2292, 8
          %s2294 = scalar_lea.vmem %s15, %s2293
        $region128: #{_lambda_.1} parent=123 // pred_fallthru
          _
      $region124: #{_lambda_.1} parent=5 // pred_fallthru
        _
    $region6: #{_lambda_.1} parent=1 // loop_footer
      %s31 = sadd.s32 1, %s27
    $region7: #{_lambda_.1} parent=1 // loop_footer_branch
      %26 = sbr.rel target = $region3
    $region8: #{_lambda_.1} parent=1 // loop_exit
      _
    %2295 = vsyncpa [#allocation3], 1
    %s2296 = scalar_lea.sflag [#allocation3], 1
    %2297 = vsyncpa %s2296, 1
    %2298 = vsyncpa [#allocation7], 1
    %2299 = vsyncpa [#allocation10], 1
    %2300 = vsyncpa [#allocation13], 1
    %2301 = vsyncpa [#allocation16], 1
    %2302 = vsyncpa [#allocation4], 1
    %s2303 = scalar_lea.sflag [#allocation4], 1
    %2304 = vsyncpa %s2303, 1

</llo_original>
